<compile_context>
chip_gen: v6e
topology: v6e:2x2x1
jax: 0.10.0
libtpu: 0.0.40
codegen_flags: <defaults>
</compile_context>

<pallas_src>
import functools

import jax
import jax.numpy as jnp
import numpy as np
from jax import lax
from jax.experimental import pallas as pl
from jax.experimental.pallas import tpu as pltpu

NEG_BIG = -1.0e30


def bilstm_logsoftmax_kernel(
    x_ref,       # (T*B, E)    flattened time-major input (batch pre-padded)
    wih_ref,     # (E, 8H)     [W_ih_f | W_ih_b]   (g-gate cols pre-scaled by 2)
    whh_ref,     # (2H, 8H)    blkdiag(W_hh_f, W_hh_b) (g-gate cols pre-scaled by 2)
    b_ref,       # (1, 8H)     [b_f | b_b]         (g-gate cols pre-scaled by 2)
    wout_ref,    # (2H, Vp)    output linear weight (transposed, V padded to Vp)
    bout_ref,    # (1, Vp)     output linear bias (padded cols = -1e30)
    out_ref,     # (T*B, Vp)   log-probs (lane-dense)
    gx,          # VMEM scratch (T*B, 8H): hoisted x @ [W_ih_f | W_ih_b] + b
    hs,          # VMEM scratch (T*B, 2H): [h_f | h_b] per timestep
    *, T, B, H,
):
    # ---- hoisted input projection (both directions, bias folded in) ----------
    gx[...] = (
        jnp.dot(x_ref[...], wih_ref[...], preferred_element_type=jnp.float32)
        + b_ref[...]
    )
    whh = whh_ref[...]                      # (2H, 8H) block-diagonal

    zeros_h = jnp.zeros((B, 2 * H), jnp.float32)
    zeros_c = jnp.zeros((B, H), jnp.float32)

    # ---- fused forward + backward recurrence ---------------------------------
    def body(t, carry):
        h, c_f, c_b = carry                                  # h = [h_f | h_b]
        rf = pl.multiple_of(t * B, B)                         # forward  reads t
        rb = pl.multiple_of((T - 1 - t) * B, B)               # backward reads T-1-t

        # single recurrent matmul for both directions (critical path)
        g = jnp.dot(h, whh, preferred_element_type=jnp.float32)      # (B, 8H)
        g = g + jnp.concatenate(
            [gx[pl.ds(rf, B), 0:4 * H], gx[pl.ds(rb, B), 4 * H:8 * H]], axis=1)

        # one sigmoid over the full fused gate vector; tanh(g) via 2*sig(2g)-1
        sg = jax.nn.sigmoid(g)
        i_f, f_f = sg[:, 0 * H:1 * H], sg[:, 1 * H:2 * H]
        gg_f, o_f = 2.0 * sg[:, 2 * H:3 * H] - 1.0, sg[:, 3 * H:4 * H]
        i_b, f_b = sg[:, 4 * H:5 * H], sg[:, 5 * H:6 * H]
        gg_b, o_b = 2.0 * sg[:, 6 * H:7 * H] - 1.0, sg[:, 7 * H:8 * H]

        c_f = f_f * c_f + i_f * gg_f
        c_b = f_b * c_b + i_b * gg_b

        # one tanh over the concatenated cell state (only remaining tanh)
        tanh_c = jnp.tanh(jnp.concatenate([c_f, c_b], axis=1))        # (B, 2H)
        h = jnp.concatenate([o_f, o_b], axis=1) * tanh_c              # (B, 2H)

        hs[pl.ds(rf, B), 0:H] = h[:, 0:H]          # forward half  -> cols 0:H
        hs[pl.ds(rb, B), H:2 * H] = h[:, H:2 * H]  # backward half -> cols H:2H
        return (h, c_f, c_b)

    lax.fori_loop(0, T, body, (zeros_h, zeros_c, zeros_c), unroll=True)

    # ---- fused output projection + log_softmax (single K=2H matmul) ----------
    logits = (
        jnp.dot(hs[...], wout_ref[...], preferred_element_type=jnp.float32)
        + bout_ref[...]
    )
    m = jnp.max(logits, axis=-1, keepdims=True)
    lse = m + jnp.log(jnp.sum(jnp.exp(logits - m), axis=-1, keepdims=True))
    out_ref[...] = logits - lse


def _round_up(x, m):
    return (x + m - 1) // m * m


def model_forward(X, lengths, params):
    """X: (T, B, E) padded time-major, lengths: (B,).
    Returns (log_probs (T, B, V), out_lens (B,))."""
    T, B, E = X.shape
    (wih_f, whh_f, b_f, wih_b, whh_b, b_b, wout, bout) = params
    H = whh_f.shape[0]
    V = wout.shape[1]

    B_pad = _round_up(max(B, 8), 8)       # sublane-aligned batch
    Vp = _round_up(max(V, 128), 128)      # lane-dense output width

    # pad batch with zero rows (discarded after the kernel)
    X_pad = jnp.zeros((T, B_pad, E), jnp.float32).at[:, :B, :].set(X)
    X_flat = X_pad.reshape(T * B_pad, E)

    # pre-scale g-gate columns by 2 so tanh(g) == 2*sigmoid(2g) - 1 in-kernel
    gscale = jnp.ones((4 * H,), jnp.float32).at[2 * H:3 * H].set(2.0)
    wih_cat = jnp.concatenate([wih_f * gscale, wih_b * gscale], axis=1)     # (E, 8H)
    b_cat = jnp.concatenate([b_f * gscale, b_b * gscale], axis=1)           # (1, 8H)
    whh_bd = jnp.zeros((2 * H, 8 * H), jnp.float32)                         # (2H, 8H)
    whh_bd = whh_bd.at[0:H, 0:4 * H].set(whh_f * gscale)
    whh_bd = whh_bd.at[H:2 * H, 4 * H:8 * H].set(whh_b * gscale)

    # pad output projection: zero weight columns, very-negative bias columns so
    # padded logits contribute exactly 0 to the softmax denominator.
    wout_p = jnp.zeros((2 * H, Vp), jnp.float32).at[:, :V].set(wout)
    bout_p = jnp.full((1, Vp), NEG_BIG, jnp.float32).at[:, :V].set(bout)

    kernel = functools.partial(bilstm_logsoftmax_kernel, T=T, B=B_pad, H=H)
    vmem = pl.BlockSpec(memory_space=pltpu.MemorySpace.VMEM)

    out_flat = pl.pallas_call(
        kernel,
        out_shape=jax.ShapeDtypeStruct((T * B_pad, Vp), jnp.float32),
        in_specs=[vmem] * 6,
        out_specs=vmem,
        scratch_shapes=[
            pltpu.VMEM((T * B_pad, 8 * H), jnp.float32),   # gx (both directions)
            pltpu.VMEM((T * B_pad, 2 * H), jnp.float32),   # hs = [h_f | h_b]
        ],
    )(X_flat, wih_cat, whh_bd, b_cat, wout_p, bout_p)

    out = out_flat.reshape(T, B_pad, Vp)[:, :B, :V]

    # pack/pad with xlens == T for all rows -> out_lens is simply full length.
    out_lens = jnp.full((lengths.shape[0],), T, dtype=jnp.int32)
    return out, out_lens


def init_params(key, embed_size, hidden_size, out_vocab):
    """Deterministic PyTorch-style uniform init; weights pre-transposed for the kernel."""
    H, E, V = hidden_size, embed_size, out_vocab
    ks = jax.random.split(key, 10)
    k_lstm = 1.0 / np.sqrt(H)
    k_lin = 1.0 / np.sqrt(2 * H)

    def u(k, shape, bound):
        return jax.random.uniform(k, shape, jnp.float32, -bound, bound)

    # forward direction (weight_ih_l0, weight_hh_l0, bias_ih_l0 + bias_hh_l0)
    wih_f = u(ks[0], (4 * H, E), k_lstm).T          # (E, 4H)
    whh_f = u(ks[1], (4 * H, H), k_lstm).T          # (H, 4H)
    b_f = (u(ks[2], (4 * H,), k_lstm) + u(ks[3], (4 * H,), k_lstm))[None, :]
    # backward direction (…_reverse)
    wih_b = u(ks[4], (4 * H, E), k_lstm).T
    whh_b = u(ks[5], (4 * H, H), k_lstm).T
    b_b = (u(ks[6], (4 * H,), k_lstm) + u(ks[7], (4 * H,), k_lstm))[None, :]
    # output linear (out_vocab, 2H) -> transposed
    wout = u(ks[8], (V, 2 * H), k_lin).T            # (2H, V)
    bout = u(ks[9], (V,), k_lin)[None, :]           # (1, V)
    return (wih_f, whh_f, b_f, wih_b, whh_b, b_b, wout, bout)


def reference_forward(X, params):
    """Pure-JAX reference (bidirectional LSTM + linear + log_softmax)."""
    (wih_f, whh_f, b_f, wih_b, whh_b, b_b, wout, bout) = params
    H = whh_f.shape[0]
    B = X.shape[1]

    def make_step(wih, whh, b):
        def step(carry, xt):
            h, c = carry
            gates = xt @ wih + h @ whh + b
            i = jax.nn.sigmoid(gates[:, 0 * H:1 * H])
            f = jax.nn.sigmoid(gates[:, 1 * H:2 * H])
            g = jnp.tanh(gates[:, 2 * H:3 * H])
            o = jax.nn.sigmoid(gates[:, 3 * H:4 * H])
            c = f * c + i * g
            h = o * jnp.tanh(c)
            return (h, c), h
        return step

    init = (jnp.zeros((B, H), jnp.float32), jnp.zeros((B, H), jnp.float32))
    _, hf = lax.scan(make_step(wih_f, whh_f, b_f), init, X)
    _, hb = lax.scan(make_step(wih_b, whh_b, b_b), init, X[::-1])
    hb = hb[::-1]
    y = jnp.concatenate([hf, hb], axis=-1)
    logits = y @ wout + bout
    return jax.nn.log_softmax(logits, axis=-1)


if __name__ == "__main__":
    # Small shapes implied by the module: seq=8, batch=2, embed=32, hidden=32, out_vocab=16.
    T, B, E, H, V = 8, 2, 32, 32, 16

    key = jax.random.PRNGKey(0)
    kx, kp = jax.random.split(key)
    X = jax.random.normal(kx, (T, B, E), jnp.float32)     # already padded (T, B, E)
    lengths = jnp.array([T, T - 2], dtype=jnp.int32)       # original module ignores these
    params = init_params(kp, E, H, V)

    out, out_lens = model_forward(X, lengths, params)
    out = jax.block_until_ready(out)
    out_lens = jax.block_until_ready(out_lens)

    ref = jax.block_until_ready(reference_forward(X, params))
    np.testing.assert_allclose(np.asarray(out), np.asarray(ref), rtol=1e-3, atol=1e-3)
    assert out.shape == (T, B, V)
    assert np.all(np.asarray(out_lens) == T)

    print("KERNEL_OK")
</pallas_src>

<mosaic_0001>
module attributes {stable_mosaic.version = 11 : i64} {
  func.func @bilstm_logsoftmax_kernel(%arg0: memref<64x32xf32, #tpu.memory_space<vmem>>, %arg1: memref<32x256xf32, #tpu.memory_space<vmem>>, %arg2: memref<64x256xf32, #tpu.memory_space<vmem>>, %arg3: memref<1x256xf32, #tpu.memory_space<vmem>>, %arg4: memref<64x128xf32, #tpu.memory_space<vmem>>, %arg5: memref<1x128xf32, #tpu.memory_space<vmem>>, %arg6: memref<64x128xf32, #tpu.memory_space<vmem>>, %arg7: memref<64x256xf32, #tpu.memory_space<vmem>>, %arg8: memref<64x64xf32, #tpu.memory_space<vmem>>) attributes {dimension_semantics = [], scalar_prefetch = 0 : i64, scratch_operands = 2 : i64, tpu.core_type = #tpu.core_type<tc>} {
    %c0 = arith.constant 0 : index
    %c0_0 = arith.constant 0 : index
    %0 = vector.load %arg0[%c0, %c0_0] : memref<64x32xf32, #tpu.memory_space<vmem>>, vector<64x32xf32>
    %c0_1 = arith.constant 0 : index
    %c0_2 = arith.constant 0 : index
    %1 = vector.load %arg1[%c0_1, %c0_2] : memref<32x256xf32, #tpu.memory_space<vmem>>, vector<32x256xf32>
    %cst = arith.constant dense<0.000000e+00> : vector<64x256xf32>
    %2 = tpu.matmul %0, %1, %cst {dimension_numbers = #tpu.dot_dimension_numbers<[1], [0], [0], [1], [0, 0, 1, 1], [], []>} : vector<64x32xf32>, vector<32x256xf32>, vector<64x256xf32> -> vector<64x256xf32>
    %c0_3 = arith.constant 0 : index
    %c0_4 = arith.constant 0 : index
    %3 = vector.load %arg3[%c0_3, %c0_4] : memref<1x256xf32, #tpu.memory_space<vmem>>, vector<1x256xf32>
    %4 = vector.broadcast %3 : vector<1x256xf32> to vector<64x256xf32>
    %5 = arith.addf %2, %4 : vector<64x256xf32>
    %c0_5 = arith.constant 0 : index
    %c0_6 = arith.constant 0 : index
    %6 = vector.load %arg7[%c0_5, %c0_6] : memref<64x256xf32, #tpu.memory_space<vmem>>, vector<64x256xf32>
    tpu.vector_store %arg7[%c0_5, %c0_6], %5 {strides = array<i32>} : memref<64x256xf32, #tpu.memory_space<vmem>>, vector<64x256xf32>,
    %c0_7 = arith.constant 0 : index
    %c0_8 = arith.constant 0 : index
    %7 = vector.load %arg2[%c0_7, %c0_8] : memref<64x256xf32, #tpu.memory_space<vmem>>, vector<64x256xf32>
    %cst_9 = arith.constant 0.000000e+00 : f32
    %8 = vector.broadcast %cst_9 : f32 to vector<8x64xf32>
    %cst_10 = arith.constant 0.000000e+00 : f32
    %9 = vector.broadcast %cst_10 : f32 to vector<8x32xf32>
    %c0_i32 = arith.constant 0 : i32
    %c8_i32 = arith.constant 8 : i32
    %10 = arith.muli %c0_i32, %c8_i32 : i32
    %11 = tpu.assume_multiple %10, 8 : i32
    %c7_i32 = arith.constant 7 : i32
    %12 = arith.subi %c7_i32, %c0_i32 : i32
    %c8_i32_11 = arith.constant 8 : i32
    %13 = arith.muli %12, %c8_i32_11 : i32
    %14 = tpu.assume_multiple %13, 8 : i32
    %cst_12 = arith.constant dense<0.000000e+00> : vector<8x256xf32>
    %15 = tpu.matmul %8, %7, %cst_12 {dimension_numbers = #tpu.dot_dimension_numbers<[1], [0], [0], [1], [0, 0, 1, 1], [], []>} : vector<8x64xf32>, vector<64x256xf32>, vector<8x256xf32> -> vector<8x256xf32>
    %16 = arith.index_cast %11 : i32 to index
    %c0_13 = arith.constant 0 : index
    %17 = vector.load %arg7[%16, %c0_13] : memref<64x256xf32, #tpu.memory_space<vmem>>, vector<8x128xf32>
    %18 = arith.index_cast %14 : i32 to index
    %c128 = arith.constant 128 : index
    %19 = vector.load %arg7[%18, %c128] : memref<64x256xf32, #tpu.memory_space<vmem>>, vector<8x128xf32>
    %20 = tpu.concatenate %17, %19 in 1 : vector<8x128xf32>, vector<8x128xf32> -> vector<8x256xf32>
    %21 = arith.addf %15, %20 : vector<8x256xf32>
    %22 = arith.negf %21 : vector<8x256xf32>
    %23 = math.exp %22 : vector<8x256xf32>
    %cst_14 = arith.constant 1.000000e+00 : f32
    %24 = vector.broadcast %cst_14 : f32 to vector<8x256xf32>
    %25 = arith.addf %24, %23 : vector<8x256xf32>
    %26 = arith.divf %24, %25 : vector<8x256xf32>
    %27 = vector.extract_strided_slice %26 {offsets = [0, 0], sizes = [8, 32], strides = [1, 1]} : vector<8x256xf32> to vector<8x32xf32>
    %28 = vector.extract_strided_slice %26 {offsets = [0, 32], sizes = [8, 32], strides = [1, 1]} : vector<8x256xf32> to vector<8x32xf32>
    %29 = vector.extract_strided_slice %26 {offsets = [0, 64], sizes = [8, 32], strides = [1, 1]} : vector<8x256xf32> to vector<8x32xf32>
    %cst_15 = arith.constant 2.000000e+00 : f32
    %30 = vector.broadcast %cst_15 : f32 to vector<8x32xf32>
    %31 = arith.mulf %30, %29 : vector<8x32xf32>
    %cst_16 = arith.constant 1.000000e+00 : f32
    %32 = vector.broadcast %cst_16 : f32 to vector<8x32xf32>
    %33 = arith.subf %31, %32 : vector<8x32xf32>
    %34 = vector.extract_strided_slice %26 {offsets = [0, 96], sizes = [8, 32], strides = [1, 1]} : vector<8x256xf32> to vector<8x32xf32>
    %35 = vector.extract_strided_slice %26 {offsets = [0, 128], sizes = [8, 32], strides = [1, 1]} : vector<8x256xf32> to vector<8x32xf32>
    %36 = vector.extract_strided_slice %26 {offsets = [0, 160], sizes = [8, 32], strides = [1, 1]} : vector<8x256xf32> to vector<8x32xf32>
    %37 = vector.extract_strided_slice %26 {offsets = [0, 192], sizes = [8, 32], strides = [1, 1]} : vector<8x256xf32> to vector<8x32xf32>
    %cst_17 = arith.constant 2.000000e+00 : f32
    %38 = vector.broadcast %cst_17 : f32 to vector<8x32xf32>
    %39 = arith.mulf %38, %37 : vector<8x32xf32>
    %cst_18 = arith.constant 1.000000e+00 : f32
    %40 = vector.broadcast %cst_18 : f32 to vector<8x32xf32>
    %41 = arith.subf %39, %40 : vector<8x32xf32>
    %42 = vector.extract_strided_slice %26 {offsets = [0, 224], sizes = [8, 32], strides = [1, 1]} : vector<8x256xf32> to vector<8x32xf32>
    %43 = arith.mulf %28, %9 : vector<8x32xf32>
    %44 = arith.mulf %27, %33 : vector<8x32xf32>
    %45 = arith.addf %43, %44 : vector<8x32xf32>
    %46 = arith.mulf %36, %9 : vector<8x32xf32>
    %47 = arith.mulf %35, %41 : vector<8x32xf32>
    %48 = arith.addf %46, %47 : vector<8x32xf32>
    %49 = tpu.concatenate %45, %48 in 1 : vector<8x32xf32>, vector<8x32xf32> -> vector<8x64xf32>
    %50 = math.tanh %49 : vector<8x64xf32>
    %51 = tpu.concatenate %34, %42 in 1 : vector<8x32xf32>, vector<8x32xf32> -> vector<8x64xf32>
    %52 = arith.mulf %51, %50 : vector<8x64xf32>
    %53 = vector.extract_strided_slice %52 {offsets = [0, 0], sizes = [8, 32], strides = [1, 1]} : vector<8x64xf32> to vector<8x32xf32>
    %54 = arith.index_cast %11 : i32 to index
    %c0_19 = arith.constant 0 : index
    %55 = vector.load %arg8[%54, %c0_19] : memref<64x64xf32, #tpu.memory_space<vmem>>, vector<8x32xf32>
    tpu.vector_store %arg8[%54, %c0_19], %53 {strides = array<i32>} : memref<64x64xf32, #tpu.memory_space<vmem>>, vector<8x32xf32>,
    %56 = vector.extract_strided_slice %52 {offsets = [0, 32], sizes = [8, 32], strides = [1, 1]} : vector<8x64xf32> to vector<8x32xf32>
    %57 = arith.index_cast %14 : i32 to index
    %c32 = arith.constant 32 : index
    %58 = vector.load %arg8[%57, %c32] : memref<64x64xf32, #tpu.memory_space<vmem>>, vector<8x32xf32>
    tpu.vector_store %arg8[%57, %c32], %56 {strides = array<i32>} : memref<64x64xf32, #tpu.memory_space<vmem>>, vector<8x32xf32>,
    %c1_i32 = arith.constant 1 : i32
    %c8_i32_20 = arith.constant 8 : i32
    %59 = arith.muli %c1_i32, %c8_i32_20 : i32
    %60 = tpu.assume_multiple %59, 8 : i32
    %c7_i32_21 = arith.constant 7 : i32
    %61 = arith.subi %c7_i32_21, %c1_i32 : i32
    %c8_i32_22 = arith.constant 8 : i32
    %62 = arith.muli %61, %c8_i32_22 : i32
    %63 = tpu.assume_multiple %62, 8 : i32
    %cst_23 = arith.constant dense<0.000000e+00> : vector<8x256xf32>
    %64 = tpu.matmul %52, %7, %cst_23 {dimension_numbers = #tpu.dot_dimension_numbers<[1], [0], [0], [1], [0, 0, 1, 1], [], []>} : vector<8x64xf32>, vector<64x256xf32>, vector<8x256xf32> -> vector<8x256xf32>
    %65 = arith.index_cast %60 : i32 to index
    %c0_24 = arith.constant 0 : index
    %66 = vector.load %arg7[%65, %c0_24] : memref<64x256xf32, #tpu.memory_space<vmem>>, vector<8x128xf32>
    %67 = arith.index_cast %63 : i32 to index
    %c128_25 = arith.constant 128 : index
    %68 = vector.load %arg7[%67, %c128_25] : memref<64x256xf32, #tpu.memory_space<vmem>>, vector<8x128xf32>
    %69 = tpu.concatenate %66, %68 in 1 : vector<8x128xf32>, vector<8x128xf32> -> vector<8x256xf32>
    %70 = arith.addf %64, %69 : vector<8x256xf32>
    %71 = arith.negf %70 : vector<8x256xf32>
    %72 = math.exp %71 : vector<8x256xf32>
    %cst_26 = arith.constant 1.000000e+00 : f32
    %73 = vector.broadcast %cst_26 : f32 to vector<8x256xf32>
    %74 = arith.addf %73, %72 : vector<8x256xf32>
    %75 = arith.divf %73, %74 : vector<8x256xf32>
    %76 = vector.extract_strided_slice %75 {offsets = [0, 0], sizes = [8, 32], strides = [1, 1]} : vector<8x256xf32> to vector<8x32xf32>
    %77 = vector.extract_strided_slice %75 {offsets = [0, 32], sizes = [8, 32], strides = [1, 1]} : vector<8x256xf32> to vector<8x32xf32>
    %78 = vector.extract_strided_slice %75 {offsets = [0, 64], sizes = [8, 32], strides = [1, 1]} : vector<8x256xf32> to vector<8x32xf32>
    %cst_27 = arith.constant 2.000000e+00 : f32
    %79 = vector.broadcast %cst_27 : f32 to vector<8x32xf32>
    %80 = arith.mulf %79, %78 : vector<8x32xf32>
    %cst_28 = arith.constant 1.000000e+00 : f32
    %81 = vector.broadcast %cst_28 : f32 to vector<8x32xf32>
    %82 = arith.subf %80, %81 : vector<8x32xf32>
    %83 = vector.extract_strided_slice %75 {offsets = [0, 96], sizes = [8, 32], strides = [1, 1]} : vector<8x256xf32> to vector<8x32xf32>
    %84 = vector.extract_strided_slice %75 {offsets = [0, 128], sizes = [8, 32], strides = [1, 1]} : vector<8x256xf32> to vector<8x32xf32>
    %85 = vector.extract_strided_slice %75 {offsets = [0, 160], sizes = [8, 32], strides = [1, 1]} : vector<8x256xf32> to vector<8x32xf32>
    %86 = vector.extract_strided_slice %75 {offsets = [0, 192], sizes = [8, 32], strides = [1, 1]} : vector<8x256xf32> to vector<8x32xf32>
    %cst_29 = arith.constant 2.000000e+00 : f32
    %87 = vector.broadcast %cst_29 : f32 to vector<8x32xf32>
    %88 = arith.mulf %87, %86 : vector<8x32xf32>
    %cst_30 = arith.constant 1.000000e+00 : f32
    %89 = vector.broadcast %cst_30 : f32 to vector<8x32xf32>
    %90 = arith.subf %88, %89 : vector<8x32xf32>
    %91 = vector.extract_strided_slice %75 {offsets = [0, 224], sizes = [8, 32], strides = [1, 1]} : vector<8x256xf32> to vector<8x32xf32>
    %92 = arith.mulf %77, %45 : vector<8x32xf32>
    %93 = arith.mulf %76, %82 : vector<8x32xf32>
    %94 = arith.addf %92, %93 : vector<8x32xf32>
    %95 = arith.mulf %85, %48 : vector<8x32xf32>
    %96 = arith.mulf %84, %90 : vector<8x32xf32>
    %97 = arith.addf %95, %96 : vector<8x32xf32>
    %98 = tpu.concatenate %94, %97 in 1 : vector<8x32xf32>, vector<8x32xf32> -> vector<8x64xf32>
    %99 = math.tanh %98 : vector<8x64xf32>
    %100 = tpu.concatenate %83, %91 in 1 : vector<8x32xf32>, vector<8x32xf32> -> vector<8x64xf32>
    %101 = arith.mulf %100, %99 : vector<8x64xf32>
    %102 = vector.extract_strided_slice %101 {offsets = [0, 0], sizes = [8, 32], strides = [1, 1]} : vector<8x64xf32> to vector<8x32xf32>
    %103 = arith.index_cast %60 : i32 to index
    %c0_31 = arith.constant 0 : index
    %104 = vector.load %arg8[%103, %c0_31] : memref<64x64xf32, #tpu.memory_space<vmem>>, vector<8x32xf32>
    tpu.vector_store %arg8[%103, %c0_31], %102 {strides = array<i32>} : memref<64x64xf32, #tpu.memory_space<vmem>>, vector<8x32xf32>,
    %105 = vector.extract_strided_slice %101 {offsets = [0, 32], sizes = [8, 32], strides = [1, 1]} : vector<8x64xf32> to vector<8x32xf32>
    %106 = arith.index_cast %63 : i32 to index
    %c32_32 = arith.constant 32 : index
    %107 = vector.load %arg8[%106, %c32_32] : memref<64x64xf32, #tpu.memory_space<vmem>>, vector<8x32xf32>
    tpu.vector_store %arg8[%106, %c32_32], %105 {strides = array<i32>} : memref<64x64xf32, #tpu.memory_space<vmem>>, vector<8x32xf32>,
    %c2_i32 = arith.constant 2 : i32
    %c8_i32_33 = arith.constant 8 : i32
    %108 = arith.muli %c2_i32, %c8_i32_33 : i32
    %109 = tpu.assume_multiple %108, 8 : i32
    %c7_i32_34 = arith.constant 7 : i32
    %110 = arith.subi %c7_i32_34, %c2_i32 : i32
    %c8_i32_35 = arith.constant 8 : i32
    %111 = arith.muli %110, %c8_i32_35 : i32
    %112 = tpu.assume_multiple %111, 8 : i32
    %cst_36 = arith.constant dense<0.000000e+00> : vector<8x256xf32>
    %113 = tpu.matmul %101, %7, %cst_36 {dimension_numbers = #tpu.dot_dimension_numbers<[1], [0], [0], [1], [0, 0, 1, 1], [], []>} : vector<8x64xf32>, vector<64x256xf32>, vector<8x256xf32> -> vector<8x256xf32>
    %114 = arith.index_cast %109 : i32 to index
    %c0_37 = arith.constant 0 : index
    %115 = vector.load %arg7[%114, %c0_37] : memref<64x256xf32, #tpu.memory_space<vmem>>, vector<8x128xf32>
    %116 = arith.index_cast %112 : i32 to index
    %c128_38 = arith.constant 128 : index
    %117 = vector.load %arg7[%116, %c128_38] : memref<64x256xf32, #tpu.memory_space<vmem>>, vector<8x128xf32>
    %118 = tpu.concatenate %115, %117 in 1 : vector<8x128xf32>, vector<8x128xf32> -> vector<8x256xf32>
    %119 = arith.addf %113, %118 : vector<8x256xf32>
    %120 = arith.negf %119 : vector<8x256xf32>
    %121 = math.exp %120 : vector<8x256xf32>
    %cst_39 = arith.constant 1.000000e+00 : f32
    %122 = vector.broadcast %cst_39 : f32 to vector<8x256xf32>
    %123 = arith.addf %122, %121 : vector<8x256xf32>
    %124 = arith.divf %122, %123 : vector<8x256xf32>
    %125 = vector.extract_strided_slice %124 {offsets = [0, 0], sizes = [8, 32], strides = [1, 1]} : vector<8x256xf32> to vector<8x32xf32>
    %126 = vector.extract_strided_slice %124 {offsets = [0, 32], sizes = [8, 32], strides = [1, 1]} : vector<8x256xf32> to vector<8x32xf32>
    %127 = vector.extract_strided_slice %124 {offsets = [0, 64], sizes = [8, 32], strides = [1, 1]} : vector<8x256xf32> to vector<8x32xf32>
    %cst_40 = arith.constant 2.000000e+00 : f32
    %128 = vector.broadcast %cst_40 : f32 to vector<8x32xf32>
    %129 = arith.mulf %128, %127 : vector<8x32xf32>
    %cst_41 = arith.constant 1.000000e+00 : f32
    %130 = vector.broadcast %cst_41 : f32 to vector<8x32xf32>
    %131 = arith.subf %129, %130 : vector<8x32xf32>
    %132 = vector.extract_strided_slice %124 {offsets = [0, 96], sizes = [8, 32], strides = [1, 1]} : vector<8x256xf32> to vector<8x32xf32>
    %133 = vector.extract_strided_slice %124 {offsets = [0, 128], sizes = [8, 32], strides = [1, 1]} : vector<8x256xf32> to vector<8x32xf32>
    %134 = vector.extract_strided_slice %124 {offsets = [0, 160], sizes = [8, 32], strides = [1, 1]} : vector<8x256xf32> to vector<8x32xf32>
    %135 = vector.extract_strided_slice %124 {offsets = [0, 192], sizes = [8, 32], strides = [1, 1]} : vector<8x256xf32> to vector<8x32xf32>
    %cst_42 = arith.constant 2.000000e+00 : f32
    %136 = vector.broadcast %cst_42 : f32 to vector<8x32xf32>
    %137 = arith.mulf %136, %135 : vector<8x32xf32>
    %cst_43 = arith.constant 1.000000e+00 : f32
    %138 = vector.broadcast %cst_43 : f32 to vector<8x32xf32>
    %139 = arith.subf %137, %138 : vector<8x32xf32>
    %140 = vector.extract_strided_slice %124 {offsets = [0, 224], sizes = [8, 32], strides = [1, 1]} : vector<8x256xf32> to vector<8x32xf32>
    %141 = arith.mulf %126, %94 : vector<8x32xf32>
    %142 = arith.mulf %125, %131 : vector<8x32xf32>
    %143 = arith.addf %141, %142 : vector<8x32xf32>
    %144 = arith.mulf %134, %97 : vector<8x32xf32>
    %145 = arith.mulf %133, %139 : vector<8x32xf32>
    %146 = arith.addf %144, %145 : vector<8x32xf32>
    %147 = tpu.concatenate %143, %146 in 1 : vector<8x32xf32>, vector<8x32xf32> -> vector<8x64xf32>
    %148 = math.tanh %147 : vector<8x64xf32>
    %149 = tpu.concatenate %132, %140 in 1 : vector<8x32xf32>, vector<8x32xf32> -> vector<8x64xf32>
    %150 = arith.mulf %149, %148 : vector<8x64xf32>
    %151 = vector.extract_strided_slice %150 {offsets = [0, 0], sizes = [8, 32], strides = [1, 1]} : vector<8x64xf32> to vector<8x32xf32>
    %152 = arith.index_cast %109 : i32 to index
    %c0_44 = arith.constant 0 : index
    %153 = vector.load %arg8[%152, %c0_44] : memref<64x64xf32, #tpu.memory_space<vmem>>, vector<8x32xf32>
    tpu.vector_store %arg8[%152, %c0_44], %151 {strides = array<i32>} : memref<64x64xf32, #tpu.memory_space<vmem>>, vector<8x32xf32>,
    %154 = vector.extract_strided_slice %150 {offsets = [0, 32], sizes = [8, 32], strides = [1, 1]} : vector<8x64xf32> to vector<8x32xf32>
    %155 = arith.index_cast %112 : i32 to index
    %c32_45 = arith.constant 32 : index
    %156 = vector.load %arg8[%155, %c32_45] : memref<64x64xf32, #tpu.memory_space<vmem>>, vector<8x32xf32>
    tpu.vector_store %arg8[%155, %c32_45], %154 {strides = array<i32>} : memref<64x64xf32, #tpu.memory_space<vmem>>, vector<8x32xf32>,
    %c3_i32 = arith.constant 3 : i32
    %c8_i32_46 = arith.constant 8 : i32
    %157 = arith.muli %c3_i32, %c8_i32_46 : i32
    %158 = tpu.assume_multiple %157, 8 : i32
    %c7_i32_47 = arith.constant 7 : i32
    %159 = arith.subi %c7_i32_47, %c3_i32 : i32
    %c8_i32_48 = arith.constant 8 : i32
    %160 = arith.muli %159, %c8_i32_48 : i32
    %161 = tpu.assume_multiple %160, 8 : i32
    %cst_49 = arith.constant dense<0.000000e+00> : vector<8x256xf32>
    %162 = tpu.matmul %150, %7, %cst_49 {dimension_numbers = #tpu.dot_dimension_numbers<[1], [0], [0], [1], [0, 0, 1, 1], [], []>} : vector<8x64xf32>, vector<64x256xf32>, vector<8x256xf32> -> vector<8x256xf32>
    %163 = arith.index_cast %158 : i32 to index
    %c0_50 = arith.constant 0 : index
    %164 = vector.load %arg7[%163, %c0_50] : memref<64x256xf32, #tpu.memory_space<vmem>>, vector<8x128xf32>
    %165 = arith.index_cast %161 : i32 to index
    %c128_51 = arith.constant 128 : index
    %166 = vector.load %arg7[%165, %c128_51] : memref<64x256xf32, #tpu.memory_space<vmem>>, vector<8x128xf32>
    %167 = tpu.concatenate %164, %166 in 1 : vector<8x128xf32>, vector<8x128xf32> -> vector<8x256xf32>
    %168 = arith.addf %162, %167 : vector<8x256xf32>
    %169 = arith.negf %168 : vector<8x256xf32>
    %170 = math.exp %169 : vector<8x256xf32>
    %cst_52 = arith.constant 1.000000e+00 : f32
    %171 = vector.broadcast %cst_52 : f32 to vector<8x256xf32>
    %172 = arith.addf %171, %170 : vector<8x256xf32>
    %173 = arith.divf %171, %172 : vector<8x256xf32>
    %174 = vector.extract_strided_slice %173 {offsets = [0, 0], sizes = [8, 32], strides = [1, 1]} : vector<8x256xf32> to vector<8x32xf32>
    %175 = vector.extract_strided_slice %173 {offsets = [0, 32], sizes = [8, 32], strides = [1, 1]} : vector<8x256xf32> to vector<8x32xf32>
    %176 = vector.extract_strided_slice %173 {offsets = [0, 64], sizes = [8, 32], strides = [1, 1]} : vector<8x256xf32> to vector<8x32xf32>
    %cst_53 = arith.constant 2.000000e+00 : f32
    %177 = vector.broadcast %cst_53 : f32 to vector<8x32xf32>
    %178 = arith.mulf %177, %176 : vector<8x32xf32>
    %cst_54 = arith.constant 1.000000e+00 : f32
    %179 = vector.broadcast %cst_54 : f32 to vector<8x32xf32>
    %180 = arith.subf %178, %179 : vector<8x32xf32>
    %181 = vector.extract_strided_slice %173 {offsets = [0, 96], sizes = [8, 32], strides = [1, 1]} : vector<8x256xf32> to vector<8x32xf32>
    %182 = vector.extract_strided_slice %173 {offsets = [0, 128], sizes = [8, 32], strides = [1, 1]} : vector<8x256xf32> to vector<8x32xf32>
    %183 = vector.extract_strided_slice %173 {offsets = [0, 160], sizes = [8, 32], strides = [1, 1]} : vector<8x256xf32> to vector<8x32xf32>
    %184 = vector.extract_strided_slice %173 {offsets = [0, 192], sizes = [8, 32], strides = [1, 1]} : vector<8x256xf32> to vector<8x32xf32>
    %cst_55 = arith.constant 2.000000e+00 : f32
    %185 = vector.broadcast %cst_55 : f32 to vector<8x32xf32>
    %186 = arith.mulf %185, %184 : vector<8x32xf32>
    %cst_56 = arith.constant 1.000000e+00 : f32
    %187 = vector.broadcast %cst_56 : f32 to vector<8x32xf32>
    %188 = arith.subf %186, %187 : vector<8x32xf32>
    %189 = vector.extract_strided_slice %173 {offsets = [0, 224], sizes = [8, 32], strides = [1, 1]} : vector<8x256xf32> to vector<8x32xf32>
    %190 = arith.mulf %175, %143 : vector<8x32xf32>
    %191 = arith.mulf %174, %180 : vector<8x32xf32>
    %192 = arith.addf %190, %191 : vector<8x32xf32>
    %193 = arith.mulf %183, %146 : vector<8x32xf32>
    %194 = arith.mulf %182, %188 : vector<8x32xf32>
    %195 = arith.addf %193, %194 : vector<8x32xf32>
    %196 = tpu.concatenate %192, %195 in 1 : vector<8x32xf32>, vector<8x32xf32> -> vector<8x64xf32>
    %197 = math.tanh %196 : vector<8x64xf32>
    %198 = tpu.concatenate %181, %189 in 1 : vector<8x32xf32>, vector<8x32xf32> -> vector<8x64xf32>
    %199 = arith.mulf %198, %197 : vector<8x64xf32>
    %200 = vector.extract_strided_slice %199 {offsets = [0, 0], sizes = [8, 32], strides = [1, 1]} : vector<8x64xf32> to vector<8x32xf32>
    %201 = arith.index_cast %158 : i32 to index
    %c0_57 = arith.constant 0 : index
    %202 = vector.load %arg8[%201, %c0_57] : memref<64x64xf32, #tpu.memory_space<vmem>>, vector<8x32xf32>
    tpu.vector_store %arg8[%201, %c0_57], %200 {strides = array<i32>} : memref<64x64xf32, #tpu.memory_space<vmem>>, vector<8x32xf32>,
    %203 = vector.extract_strided_slice %199 {offsets = [0, 32], sizes = [8, 32], strides = [1, 1]} : vector<8x64xf32> to vector<8x32xf32>
    %204 = arith.index_cast %161 : i32 to index
    %c32_58 = arith.constant 32 : index
    %205 = vector.load %arg8[%204, %c32_58] : memref<64x64xf32, #tpu.memory_space<vmem>>, vector<8x32xf32>
    tpu.vector_store %arg8[%204, %c32_58], %203 {strides = array<i32>} : memref<64x64xf32, #tpu.memory_space<vmem>>, vector<8x32xf32>,
    %c4_i32 = arith.constant 4 : i32
    %c8_i32_59 = arith.constant 8 : i32
    %206 = arith.muli %c4_i32, %c8_i32_59 : i32
    %207 = tpu.assume_multiple %206, 8 : i32
    %c7_i32_60 = arith.constant 7 : i32
    %208 = arith.subi %c7_i32_60, %c4_i32 : i32
    %c8_i32_61 = arith.constant 8 : i32
    %209 = arith.muli %208, %c8_i32_61 : i32
    %210 = tpu.assume_multiple %209, 8 : i32
    %cst_62 = arith.constant dense<0.000000e+00> : vector<8x256xf32>
    %211 = tpu.matmul %199, %7, %cst_62 {dimension_numbers = #tpu.dot_dimension_numbers<[1], [0], [0], [1], [0, 0, 1, 1], [], []>} : vector<8x64xf32>, vector<64x256xf32>, vector<8x256xf32> -> vector<8x256xf32>
    %212 = arith.index_cast %207 : i32 to index
    %c0_63 = arith.constant 0 : index
    %213 = vector.load %arg7[%212, %c0_63] : memref<64x256xf32, #tpu.memory_space<vmem>>, vector<8x128xf32>
    %214 = arith.index_cast %210 : i32 to index
    %c128_64 = arith.constant 128 : index
    %215 = vector.load %arg7[%214, %c128_64] : memref<64x256xf32, #tpu.memory_space<vmem>>, vector<8x128xf32>
    %216 = tpu.concatenate %213, %215 in 1 : vector<8x128xf32>, vector<8x128xf32> -> vector<8x256xf32>
    %217 = arith.addf %211, %216 : vector<8x256xf32>
    %218 = arith.negf %217 : vector<8x256xf32>
    %219 = math.exp %218 : vector<8x256xf32>
    %cst_65 = arith.constant 1.000000e+00 : f32
    %220 = vector.broadcast %cst_65 : f32 to vector<8x256xf32>
    %221 = arith.addf %220, %219 : vector<8x256xf32>
    %222 = arith.divf %220, %221 : vector<8x256xf32>
    %223 = vector.extract_strided_slice %222 {offsets = [0, 0], sizes = [8, 32], strides = [1, 1]} : vector<8x256xf32> to vector<8x32xf32>
    %224 = vector.extract_strided_slice %222 {offsets = [0, 32], sizes = [8, 32], strides = [1, 1]} : vector<8x256xf32> to vector<8x32xf32>
    %225 = vector.extract_strided_slice %222 {offsets = [0, 64], sizes = [8, 32], strides = [1, 1]} : vector<8x256xf32> to vector<8x32xf32>
    %cst_66 = arith.constant 2.000000e+00 : f32
    %226 = vector.broadcast %cst_66 : f32 to vector<8x32xf32>
    %227 = arith.mulf %226, %225 : vector<8x32xf32>
    %cst_67 = arith.constant 1.000000e+00 : f32
    %228 = vector.broadcast %cst_67 : f32 to vector<8x32xf32>
    %229 = arith.subf %227, %228 : vector<8x32xf32>
    %230 = vector.extract_strided_slice %222 {offsets = [0, 96], sizes = [8, 32], strides = [1, 1]} : vector<8x256xf32> to vector<8x32xf32>
    %231 = vector.extract_strided_slice %222 {offsets = [0, 128], sizes = [8, 32], strides = [1, 1]} : vector<8x256xf32> to vector<8x32xf32>
    %232 = vector.extract_strided_slice %222 {offsets = [0, 160], sizes = [8, 32], strides = [1, 1]} : vector<8x256xf32> to vector<8x32xf32>
    %233 = vector.extract_strided_slice %222 {offsets = [0, 192], sizes = [8, 32], strides = [1, 1]} : vector<8x256xf32> to vector<8x32xf32>
    %cst_68 = arith.constant 2.000000e+00 : f32
    %234 = vector.broadcast %cst_68 : f32 to vector<8x32xf32>
    %235 = arith.mulf %234, %233 : vector<8x32xf32>
    %cst_69 = arith.constant 1.000000e+00 : f32
    %236 = vector.broadcast %cst_69 : f32 to vector<8x32xf32>
    %237 = arith.subf %235, %236 : vector<8x32xf32>
    %238 = vector.extract_strided_slice %222 {offsets = [0, 224], sizes = [8, 32], strides = [1, 1]} : vector<8x256xf32> to vector<8x32xf32>
    %239 = arith.mulf %224, %192 : vector<8x32xf32>
    %240 = arith.mulf %223, %229 : vector<8x32xf32>
    %241 = arith.addf %239, %240 : vector<8x32xf32>
    %242 = arith.mulf %232, %195 : vector<8x32xf32>
    %243 = arith.mulf %231, %237 : vector<8x32xf32>
    %244 = arith.addf %242, %243 : vector<8x32xf32>
    %245 = tpu.concatenate %241, %244 in 1 : vector<8x32xf32>, vector<8x32xf32> -> vector<8x64xf32>
    %246 = math.tanh %245 : vector<8x64xf32>
    %247 = tpu.concatenate %230, %238 in 1 : vector<8x32xf32>, vector<8x32xf32> -> vector<8x64xf32>
    %248 = arith.mulf %247, %246 : vector<8x64xf32>
    %249 = vector.extract_strided_slice %248 {offsets = [0, 0], sizes = [8, 32], strides = [1, 1]} : vector<8x64xf32> to vector<8x32xf32>
    %250 = arith.index_cast %207 : i32 to index
    %c0_70 = arith.constant 0 : index
    %251 = vector.load %arg8[%250, %c0_70] : memref<64x64xf32, #tpu.memory_space<vmem>>, vector<8x32xf32>
    tpu.vector_store %arg8[%250, %c0_70], %249 {strides = array<i32>} : memref<64x64xf32, #tpu.memory_space<vmem>>, vector<8x32xf32>,
    %252 = vector.extract_strided_slice %248 {offsets = [0, 32], sizes = [8, 32], strides = [1, 1]} : vector<8x64xf32> to vector<8x32xf32>
    %253 = arith.index_cast %210 : i32 to index
    %c32_71 = arith.constant 32 : index
    %254 = vector.load %arg8[%253, %c32_71] : memref<64x64xf32, #tpu.memory_space<vmem>>, vector<8x32xf32>
    tpu.vector_store %arg8[%253, %c32_71], %252 {strides = array<i32>} : memref<64x64xf32, #tpu.memory_space<vmem>>, vector<8x32xf32>,
    %c5_i32 = arith.constant 5 : i32
    %c8_i32_72 = arith.constant 8 : i32
    %255 = arith.muli %c5_i32, %c8_i32_72 : i32
    %256 = tpu.assume_multiple %255, 8 : i32
    %c7_i32_73 = arith.constant 7 : i32
    %257 = arith.subi %c7_i32_73, %c5_i32 : i32
    %c8_i32_74 = arith.constant 8 : i32
    %258 = arith.muli %257, %c8_i32_74 : i32
    %259 = tpu.assume_multiple %258, 8 : i32
    %cst_75 = arith.constant dense<0.000000e+00> : vector<8x256xf32>
    %260 = tpu.matmul %248, %7, %cst_75 {dimension_numbers = #tpu.dot_dimension_numbers<[1], [0], [0], [1], [0, 0, 1, 1], [], []>} : vector<8x64xf32>, vector<64x256xf32>, vector<8x256xf32> -> vector<8x256xf32>
    %261 = arith.index_cast %256 : i32 to index
    %c0_76 = arith.constant 0 : index
    %262 = vector.load %arg7[%261, %c0_76] : memref<64x256xf32, #tpu.memory_space<vmem>>, vector<8x128xf32>
    %263 = arith.index_cast %259 : i32 to index
    %c128_77 = arith.constant 128 : index
    %264 = vector.load %arg7[%263, %c128_77] : memref<64x256xf32, #tpu.memory_space<vmem>>, vector<8x128xf32>
    %265 = tpu.concatenate %262, %264 in 1 : vector<8x128xf32>, vector<8x128xf32> -> vector<8x256xf32>
    %266 = arith.addf %260, %265 : vector<8x256xf32>
    %267 = arith.negf %266 : vector<8x256xf32>
    %268 = math.exp %267 : vector<8x256xf32>
    %cst_78 = arith.constant 1.000000e+00 : f32
    %269 = vector.broadcast %cst_78 : f32 to vector<8x256xf32>
    %270 = arith.addf %269, %268 : vector<8x256xf32>
    %271 = arith.divf %269, %270 : vector<8x256xf32>
    %272 = vector.extract_strided_slice %271 {offsets = [0, 0], sizes = [8, 32], strides = [1, 1]} : vector<8x256xf32> to vector<8x32xf32>
    %273 = vector.extract_strided_slice %271 {offsets = [0, 32], sizes = [8, 32], strides = [1, 1]} : vector<8x256xf32> to vector<8x32xf32>
    %274 = vector.extract_strided_slice %271 {offsets = [0, 64], sizes = [8, 32], strides = [1, 1]} : vector<8x256xf32> to vector<8x32xf32>
    %cst_79 = arith.constant 2.000000e+00 : f32
    %275 = vector.broadcast %cst_79 : f32 to vector<8x32xf32>
    %276 = arith.mulf %275, %274 : vector<8x32xf32>
    %cst_80 = arith.constant 1.000000e+00 : f32
    %277 = vector.broadcast %cst_80 : f32 to vector<8x32xf32>
    %278 = arith.subf %276, %277 : vector<8x32xf32>
    %279 = vector.extract_strided_slice %271 {offsets = [0, 96], sizes = [8, 32], strides = [1, 1]} : vector<8x256xf32> to vector<8x32xf32>
    %280 = vector.extract_strided_slice %271 {offsets = [0, 128], sizes = [8, 32], strides = [1, 1]} : vector<8x256xf32> to vector<8x32xf32>
    %281 = vector.extract_strided_slice %271 {offsets = [0, 160], sizes = [8, 32], strides = [1, 1]} : vector<8x256xf32> to vector<8x32xf32>
    %282 = vector.extract_strided_slice %271 {offsets = [0, 192], sizes = [8, 32], strides = [1, 1]} : vector<8x256xf32> to vector<8x32xf32>
    %cst_81 = arith.constant 2.000000e+00 : f32
    %283 = vector.broadcast %cst_81 : f32 to vector<8x32xf32>
    %284 = arith.mulf %283, %282 : vector<8x32xf32>
    %cst_82 = arith.constant 1.000000e+00 : f32
    %285 = vector.broadcast %cst_82 : f32 to vector<8x32xf32>
    %286 = arith.subf %284, %285 : vector<8x32xf32>
    %287 = vector.extract_strided_slice %271 {offsets = [0, 224], sizes = [8, 32], strides = [1, 1]} : vector<8x256xf32> to vector<8x32xf32>
    %288 = arith.mulf %273, %241 : vector<8x32xf32>
    %289 = arith.mulf %272, %278 : vector<8x32xf32>
    %290 = arith.addf %288, %289 : vector<8x32xf32>
    %291 = arith.mulf %281, %244 : vector<8x32xf32>
    %292 = arith.mulf %280, %286 : vector<8x32xf32>
    %293 = arith.addf %291, %292 : vector<8x32xf32>
    %294 = tpu.concatenate %290, %293 in 1 : vector<8x32xf32>, vector<8x32xf32> -> vector<8x64xf32>
    %295 = math.tanh %294 : vector<8x64xf32>
    %296 = tpu.concatenate %279, %287 in 1 : vector<8x32xf32>, vector<8x32xf32> -> vector<8x64xf32>
    %297 = arith.mulf %296, %295 : vector<8x64xf32>
    %298 = vector.extract_strided_slice %297 {offsets = [0, 0], sizes = [8, 32], strides = [1, 1]} : vector<8x64xf32> to vector<8x32xf32>
    %299 = arith.index_cast %256 : i32 to index
    %c0_83 = arith.constant 0 : index
    %300 = vector.load %arg8[%299, %c0_83] : memref<64x64xf32, #tpu.memory_space<vmem>>, vector<8x32xf32>
    tpu.vector_store %arg8[%299, %c0_83], %298 {strides = array<i32>} : memref<64x64xf32, #tpu.memory_space<vmem>>, vector<8x32xf32>,
    %301 = vector.extract_strided_slice %297 {offsets = [0, 32], sizes = [8, 32], strides = [1, 1]} : vector<8x64xf32> to vector<8x32xf32>
    %302 = arith.index_cast %259 : i32 to index
    %c32_84 = arith.constant 32 : index
    %303 = vector.load %arg8[%302, %c32_84] : memref<64x64xf32, #tpu.memory_space<vmem>>, vector<8x32xf32>
    tpu.vector_store %arg8[%302, %c32_84], %301 {strides = array<i32>} : memref<64x64xf32, #tpu.memory_space<vmem>>, vector<8x32xf32>,
    %c6_i32 = arith.constant 6 : i32
    %c8_i32_85 = arith.constant 8 : i32
    %304 = arith.muli %c6_i32, %c8_i32_85 : i32
    %305 = tpu.assume_multiple %304, 8 : i32
    %c7_i32_86 = arith.constant 7 : i32
    %306 = arith.subi %c7_i32_86, %c6_i32 : i32
    %c8_i32_87 = arith.constant 8 : i32
    %307 = arith.muli %306, %c8_i32_87 : i32
    %308 = tpu.assume_multiple %307, 8 : i32
    %cst_88 = arith.constant dense<0.000000e+00> : vector<8x256xf32>
    %309 = tpu.matmul %297, %7, %cst_88 {dimension_numbers = #tpu.dot_dimension_numbers<[1], [0], [0], [1], [0, 0, 1, 1], [], []>} : vector<8x64xf32>, vector<64x256xf32>, vector<8x256xf32> -> vector<8x256xf32>
    %310 = arith.index_cast %305 : i32 to index
    %c0_89 = arith.constant 0 : index
    %311 = vector.load %arg7[%310, %c0_89] : memref<64x256xf32, #tpu.memory_space<vmem>>, vector<8x128xf32>
    %312 = arith.index_cast %308 : i32 to index
    %c128_90 = arith.constant 128 : index
    %313 = vector.load %arg7[%312, %c128_90] : memref<64x256xf32, #tpu.memory_space<vmem>>, vector<8x128xf32>
    %314 = tpu.concatenate %311, %313 in 1 : vector<8x128xf32>, vector<8x128xf32> -> vector<8x256xf32>
    %315 = arith.addf %309, %314 : vector<8x256xf32>
    %316 = arith.negf %315 : vector<8x256xf32>
    %317 = math.exp %316 : vector<8x256xf32>
    %cst_91 = arith.constant 1.000000e+00 : f32
    %318 = vector.broadcast %cst_91 : f32 to vector<8x256xf32>
    %319 = arith.addf %318, %317 : vector<8x256xf32>
    %320 = arith.divf %318, %319 : vector<8x256xf32>
    %321 = vector.extract_strided_slice %320 {offsets = [0, 0], sizes = [8, 32], strides = [1, 1]} : vector<8x256xf32> to vector<8x32xf32>
    %322 = vector.extract_strided_slice %320 {offsets = [0, 32], sizes = [8, 32], strides = [1, 1]} : vector<8x256xf32> to vector<8x32xf32>
    %323 = vector.extract_strided_slice %320 {offsets = [0, 64], sizes = [8, 32], strides = [1, 1]} : vector<8x256xf32> to vector<8x32xf32>
    %cst_92 = arith.constant 2.000000e+00 : f32
    %324 = vector.broadcast %cst_92 : f32 to vector<8x32xf32>
    %325 = arith.mulf %324, %323 : vector<8x32xf32>
    %cst_93 = arith.constant 1.000000e+00 : f32
    %326 = vector.broadcast %cst_93 : f32 to vector<8x32xf32>
    %327 = arith.subf %325, %326 : vector<8x32xf32>
    %328 = vector.extract_strided_slice %320 {offsets = [0, 96], sizes = [8, 32], strides = [1, 1]} : vector<8x256xf32> to vector<8x32xf32>
    %329 = vector.extract_strided_slice %320 {offsets = [0, 128], sizes = [8, 32], strides = [1, 1]} : vector<8x256xf32> to vector<8x32xf32>
    %330 = vector.extract_strided_slice %320 {offsets = [0, 160], sizes = [8, 32], strides = [1, 1]} : vector<8x256xf32> to vector<8x32xf32>
    %331 = vector.extract_strided_slice %320 {offsets = [0, 192], sizes = [8, 32], strides = [1, 1]} : vector<8x256xf32> to vector<8x32xf32>
    %cst_94 = arith.constant 2.000000e+00 : f32
    %332 = vector.broadcast %cst_94 : f32 to vector<8x32xf32>
    %333 = arith.mulf %332, %331 : vector<8x32xf32>
    %cst_95 = arith.constant 1.000000e+00 : f32
    %334 = vector.broadcast %cst_95 : f32 to vector<8x32xf32>
    %335 = arith.subf %333, %334 : vector<8x32xf32>
    %336 = vector.extract_strided_slice %320 {offsets = [0, 224], sizes = [8, 32], strides = [1, 1]} : vector<8x256xf32> to vector<8x32xf32>
    %337 = arith.mulf %322, %290 : vector<8x32xf32>
    %338 = arith.mulf %321, %327 : vector<8x32xf32>
    %339 = arith.addf %337, %338 : vector<8x32xf32>
    %340 = arith.mulf %330, %293 : vector<8x32xf32>
    %341 = arith.mulf %329, %335 : vector<8x32xf32>
    %342 = arith.addf %340, %341 : vector<8x32xf32>
    %343 = tpu.concatenate %339, %342 in 1 : vector<8x32xf32>, vector<8x32xf32> -> vector<8x64xf32>
    %344 = math.tanh %343 : vector<8x64xf32>
    %345 = tpu.concatenate %328, %336 in 1 : vector<8x32xf32>, vector<8x32xf32> -> vector<8x64xf32>
    %346 = arith.mulf %345, %344 : vector<8x64xf32>
    %347 = vector.extract_strided_slice %346 {offsets = [0, 0], sizes = [8, 32], strides = [1, 1]} : vector<8x64xf32> to vector<8x32xf32>
    %348 = arith.index_cast %305 : i32 to index
    %c0_96 = arith.constant 0 : index
    %349 = vector.load %arg8[%348, %c0_96] : memref<64x64xf32, #tpu.memory_space<vmem>>, vector<8x32xf32>
    tpu.vector_store %arg8[%348, %c0_96], %347 {strides = array<i32>} : memref<64x64xf32, #tpu.memory_space<vmem>>, vector<8x32xf32>,
    %350 = vector.extract_strided_slice %346 {offsets = [0, 32], sizes = [8, 32], strides = [1, 1]} : vector<8x64xf32> to vector<8x32xf32>
    %351 = arith.index_cast %308 : i32 to index
    %c32_97 = arith.constant 32 : index
    %352 = vector.load %arg8[%351, %c32_97] : memref<64x64xf32, #tpu.memory_space<vmem>>, vector<8x32xf32>
    tpu.vector_store %arg8[%351, %c32_97], %350 {strides = array<i32>} : memref<64x64xf32, #tpu.memory_space<vmem>>, vector<8x32xf32>,
    %c7_i32_98 = arith.constant 7 : i32
    %c8_i32_99 = arith.constant 8 : i32
    %353 = arith.muli %c7_i32_98, %c8_i32_99 : i32
    %354 = tpu.assume_multiple %353, 8 : i32
    %c7_i32_100 = arith.constant 7 : i32
    %355 = arith.subi %c7_i32_100, %c7_i32_98 : i32
    %c8_i32_101 = arith.constant 8 : i32
    %356 = arith.muli %355, %c8_i32_101 : i32
    %357 = tpu.assume_multiple %356, 8 : i32
    %cst_102 = arith.constant dense<0.000000e+00> : vector<8x256xf32>
    %358 = tpu.matmul %346, %7, %cst_102 {dimension_numbers = #tpu.dot_dimension_numbers<[1], [0], [0], [1], [0, 0, 1, 1], [], []>} : vector<8x64xf32>, vector<64x256xf32>, vector<8x256xf32> -> vector<8x256xf32>
    %359 = arith.index_cast %354 : i32 to index
    %c0_103 = arith.constant 0 : index
    %360 = vector.load %arg7[%359, %c0_103] : memref<64x256xf32, #tpu.memory_space<vmem>>, vector<8x128xf32>
    %361 = arith.index_cast %357 : i32 to index
    %c128_104 = arith.constant 128 : index
    %362 = vector.load %arg7[%361, %c128_104] : memref<64x256xf32, #tpu.memory_space<vmem>>, vector<8x128xf32>
    %363 = tpu.concatenate %360, %362 in 1 : vector<8x128xf32>, vector<8x128xf32> -> vector<8x256xf32>
    %364 = arith.addf %358, %363 : vector<8x256xf32>
    %365 = arith.negf %364 : vector<8x256xf32>
    %366 = math.exp %365 : vector<8x256xf32>
    %cst_105 = arith.constant 1.000000e+00 : f32
    %367 = vector.broadcast %cst_105 : f32 to vector<8x256xf32>
    %368 = arith.addf %367, %366 : vector<8x256xf32>
    %369 = arith.divf %367, %368 : vector<8x256xf32>
    %370 = vector.extract_strided_slice %369 {offsets = [0, 0], sizes = [8, 32], strides = [1, 1]} : vector<8x256xf32> to vector<8x32xf32>
    %371 = vector.extract_strided_slice %369 {offsets = [0, 32], sizes = [8, 32], strides = [1, 1]} : vector<8x256xf32> to vector<8x32xf32>
    %372 = vector.extract_strided_slice %369 {offsets = [0, 64], sizes = [8, 32], strides = [1, 1]} : vector<8x256xf32> to vector<8x32xf32>
    %cst_106 = arith.constant 2.000000e+00 : f32
    %373 = vector.broadcast %cst_106 : f32 to vector<8x32xf32>
    %374 = arith.mulf %373, %372 : vector<8x32xf32>
    %cst_107 = arith.constant 1.000000e+00 : f32
    %375 = vector.broadcast %cst_107 : f32 to vector<8x32xf32>
    %376 = arith.subf %374, %375 : vector<8x32xf32>
    %377 = vector.extract_strided_slice %369 {offsets = [0, 96], sizes = [8, 32], strides = [1, 1]} : vector<8x256xf32> to vector<8x32xf32>
    %378 = vector.extract_strided_slice %369 {offsets = [0, 128], sizes = [8, 32], strides = [1, 1]} : vector<8x256xf32> to vector<8x32xf32>
    %379 = vector.extract_strided_slice %369 {offsets = [0, 160], sizes = [8, 32], strides = [1, 1]} : vector<8x256xf32> to vector<8x32xf32>
    %380 = vector.extract_strided_slice %369 {offsets = [0, 192], sizes = [8, 32], strides = [1, 1]} : vector<8x256xf32> to vector<8x32xf32>
    %cst_108 = arith.constant 2.000000e+00 : f32
    %381 = vector.broadcast %cst_108 : f32 to vector<8x32xf32>
    %382 = arith.mulf %381, %380 : vector<8x32xf32>
    %cst_109 = arith.constant 1.000000e+00 : f32
    %383 = vector.broadcast %cst_109 : f32 to vector<8x32xf32>
    %384 = arith.subf %382, %383 : vector<8x32xf32>
    %385 = vector.extract_strided_slice %369 {offsets = [0, 224], sizes = [8, 32], strides = [1, 1]} : vector<8x256xf32> to vector<8x32xf32>
    %386 = arith.mulf %371, %339 : vector<8x32xf32>
    %387 = arith.mulf %370, %376 : vector<8x32xf32>
    %388 = arith.addf %386, %387 : vector<8x32xf32>
    %389 = arith.mulf %379, %342 : vector<8x32xf32>
    %390 = arith.mulf %378, %384 : vector<8x32xf32>
    %391 = arith.addf %389, %390 : vector<8x32xf32>
    %392 = tpu.concatenate %388, %391 in 1 : vector<8x32xf32>, vector<8x32xf32> -> vector<8x64xf32>
    %393 = math.tanh %392 : vector<8x64xf32>
    %394 = tpu.concatenate %377, %385 in 1 : vector<8x32xf32>, vector<8x32xf32> -> vector<8x64xf32>
    %395 = arith.mulf %394, %393 : vector<8x64xf32>
    %396 = vector.extract_strided_slice %395 {offsets = [0, 0], sizes = [8, 32], strides = [1, 1]} : vector<8x64xf32> to vector<8x32xf32>
    %397 = arith.index_cast %354 : i32 to index
    %c0_110 = arith.constant 0 : index
    %398 = vector.load %arg8[%397, %c0_110] : memref<64x64xf32, #tpu.memory_space<vmem>>, vector<8x32xf32>
    tpu.vector_store %arg8[%397, %c0_110], %396 {strides = array<i32>} : memref<64x64xf32, #tpu.memory_space<vmem>>, vector<8x32xf32>,
    %399 = vector.extract_strided_slice %395 {offsets = [0, 32], sizes = [8, 32], strides = [1, 1]} : vector<8x64xf32> to vector<8x32xf32>
    %400 = arith.index_cast %357 : i32 to index
    %c32_111 = arith.constant 32 : index
    %401 = vector.load %arg8[%400, %c32_111] : memref<64x64xf32, #tpu.memory_space<vmem>>, vector<8x32xf32>
    tpu.vector_store %arg8[%400, %c32_111], %399 {strides = array<i32>} : memref<64x64xf32, #tpu.memory_space<vmem>>, vector<8x32xf32>,
    %c8_i32_112 = arith.constant 8 : i32
    %c0_113 = arith.constant 0 : index
    %c0_114 = arith.constant 0 : index
    %402 = vector.load %arg8[%c0_113, %c0_114] : memref<64x64xf32, #tpu.memory_space<vmem>>, vector<64x64xf32>
    %c0_115 = arith.constant 0 : index
    %c0_116 = arith.constant 0 : index
    %403 = vector.load %arg4[%c0_115, %c0_116] : memref<64x128xf32, #tpu.memory_space<vmem>>, vector<64x128xf32>
    %cst_117 = arith.constant dense<0.000000e+00> : vector<64x128xf32>
    %404 = tpu.matmul %402, %403, %cst_117 {dimension_numbers = #tpu.dot_dimension_numbers<[1], [0], [0], [1], [0, 0, 1, 1], [], []>} : vector<64x64xf32>, vector<64x128xf32>, vector<64x128xf32> -> vector<64x128xf32>
    %c0_118 = arith.constant 0 : index
    %c0_119 = arith.constant 0 : index
    %405 = vector.load %arg5[%c0_118, %c0_119] : memref<1x128xf32, #tpu.memory_space<vmem>>, vector<1x128xf32>
    %406 = vector.broadcast %405 : vector<1x128xf32> to vector<64x128xf32>
    %407 = arith.addf %404, %406 : vector<64x128xf32>
    %cst_120 = arith.constant dense<0xFF800000> : vector<64xf32>
    %408 = vector.multi_reduction <maximumf>, %407, %cst_120 [1] : vector<64x128xf32> to vector<64xf32>
    %409 = vector.shape_cast %408 : vector<64xf32> to vector<64x1xf32>
    %410 = vector.broadcast %409 : vector<64x1xf32> to vector<64x128xf32>
    %411 = arith.subf %407, %410 : vector<64x128xf32>
    %412 = math.exp %411 : vector<64x128xf32>
    %cst_121 = arith.constant dense<0.000000e+00> : vector<64xf32>
    %413 = vector.multi_reduction <add>, %412, %cst_121 [1] : vector<64x128xf32> to vector<64xf32>
    %414 = vector.shape_cast %413 : vector<64xf32> to vector<64x1xf32>
    %415 = math.log %414 : vector<64x1xf32>
    %416 = arith.addf %409, %415 : vector<64x1xf32>
    %417 = vector.broadcast %416 : vector<64x1xf32> to vector<64x128xf32>
    %418 = arith.subf %407, %417 : vector<64x128xf32>
    %c0_122 = arith.constant 0 : index
    %c0_123 = arith.constant 0 : index
    %419 = vector.load %arg6[%c0_122, %c0_123] : memref<64x128xf32, #tpu.memory_space<vmem>>, vector<64x128xf32>
    tpu.vector_store %arg6[%c0_122, %c0_123], %418 {strides = array<i32>} : memref<64x128xf32, #tpu.memory_space<vmem>>, vector<64x128xf32>,
    return
  }
}

</mosaic_0001>

<llo_original>
// kernel: tpu_custom_call.1
$region0: #{tpu_custom_call.1}
  #allocation0 [shape = 'u32[]', space=smem, size = 0x4, offset = 0x4, fixed_abs, tag = 'smem constant byte address 0x4 - core index']
  #allocation1 [shape = 'u32[144,128]{1,0:T(1,128)}', space=vmem, size = 0x12000, scoped, tag = 'internal scratch']
  #allocation2 [shape = 'f32[64,256]{1,0:T(8,128)}', space=vmem, size = 0x10000, scoped, tag = 'scratch operand']
  #allocation3 [shape = 'f32[64,64]{1,0:T(8,128)}', space=vmem, size = 0x8000, scoped, tag = 'scratch operand']
  %s0 = inlined_call_operand.vmem [shape: f32[64,32], index: 0, kind: input, shape index: {}]
  %s1 = inlined_call_operand.vmem [shape: f32[32,256], index: 1, kind: input, shape index: {}]
  %s2 = inlined_call_operand.hbm [shape: f32[64,256], index: 2, kind: input, shape index: {}]
  %s3 = inlined_call_operand.vmem [shape: f32[1,256], index: 3, kind: input, shape index: {}]
  %s4 = inlined_call_operand.hbm [shape: f32[64,128], index: 4, kind: input, shape index: {}]
  %s5 = inlined_call_operand.vmem [shape: f32[1,128], index: 5, kind: input, shape index: {}]
  %s6 = inlined_call_operand.hbm [shape: f32[64,128], index: 6, kind: output, shape index: {}]
  %s7 = sld [smem:[#allocation0]]
  $region42: #{tpu_custom_call.1} parent=0
    _
  %s9 = ssub.s32 1, %s7
  %s10 = scalar_select 0, %s9, %s7
  $region1: #{tpu_custom_call.1} parent=0
    #allocation4 [shape = 'u8[65536]{0}', space=vmem, size = 0x10000, scoped, tag = 'input window, operand 2, single buffered']
    #allocation5 [shape = 's32[1]{0}', space=sflag, size = 0x4, scoped, tag = 'scoped memory for tpu_custom_call.1']
    #allocation6 [shape = 's32[1]{0}', space=sflag, size = 0x4, scoped, tag = 'scoped memory for tpu_custom_call.1']
    #allocation7 [shape = 'u8[32768]{0}', space=vmem, size = 0x8000, scoped, tag = 'input window, operand 4, single buffered']
    #allocation8 [shape = 's32[1]{0}', space=sflag, size = 0x4, scoped, tag = 'scoped memory for tpu_custom_call.1']
    #allocation9 [shape = 'u8[32768]{0}', space=vmem, size = 0x8000, scoped, tag = 'output window, operand 0, single buffered']
    %11 = vsyncpa [#allocation5], 0
    %12 = vsyncpa [#allocation8], 0
    %13 = vsyncpa [#allocation6], 0
    // Predicated region
    $region2: #{tpu_custom_call.1} parent=1 // pred_check
      _
    $region3: #{tpu_custom_call.1} parent=1 // pred_check_branch
      %15 = sbr.rel (0) target = $region5
    $region4: #{tpu_custom_call.1} parent=1 // pred_region
      _
    $region5: #{tpu_custom_call.1} parent=1 // pred_fallthru
      _
    // Predicated region
    $region6: #{tpu_custom_call.1} parent=1 // pred_check
      _
    $region7: #{tpu_custom_call.1} parent=1 // pred_check_branch
      %17 = sbr.rel (0) target = $region9
    $region8: #{tpu_custom_call.1} parent=1 // pred_region
      _
    $region9: #{tpu_custom_call.1} parent=1 // pred_fallthru
      _
    // Predicated region
    $region10: #{tpu_custom_call.1} parent=1 // pred_check
      _
    $region11: #{tpu_custom_call.1} parent=1 // pred_check_branch
      %19 = sbr.rel (0) target = $region13
    $region12: #{tpu_custom_call.1} parent=1 // pred_region
      %s21 = ssub.s32 2048, 2048
      %22 = vsyncadd [#allocation5], %s21
      %s23 = sshll.u32 [#allocation4], 4
      %s24 = int_to_ptr.vmem [resolvable:$true] %s23
      %29 = dma.hbm_to_vmem [thread:$0]  %s2, 2048, %s24, [#allocation5], 256, 256, 16
    $region13: #{tpu_custom_call.1} parent=1 // pred_fallthru
      _
    // Predicated region
    $region14: #{tpu_custom_call.1} parent=1 // pred_check
      _
    $region15: #{tpu_custom_call.1} parent=1 // pred_check_branch
      %31 = sbr.rel (0) target = $region17
    $region16: #{tpu_custom_call.1} parent=1 // pred_region
      _
    $region17: #{tpu_custom_call.1} parent=1 // pred_fallthru
      _
    // Predicated region
    $region18: #{tpu_custom_call.1} parent=1 // pred_check
      _
    $region19: #{tpu_custom_call.1} parent=1 // pred_check_branch
      %33 = sbr.rel (0) target = $region21
    $region20: #{tpu_custom_call.1} parent=1 // pred_region
      %s35 = ssub.s32 1024, 1024
      %36 = vsyncadd [#allocation8], %s35
      %s37 = sshll.u32 [#allocation7], 4
      %s38 = int_to_ptr.vmem [resolvable:$true] %s37
      %43 = dma.hbm_to_vmem [thread:$0]  %s4, 1024, %s38, [#allocation8], 128, 128, 8
    $region21: #{tpu_custom_call.1} parent=1 // pred_fallthru
      _
    // Predicated region
    $region22: #{tpu_custom_call.1} parent=1 // pred_check
      _
    $region23: #{tpu_custom_call.1} parent=1 // pred_check_branch
      %45 = sbr.rel (0) target = $region25
    $region24: #{tpu_custom_call.1} parent=1 // pred_region
      _
    $region25: #{tpu_custom_call.1} parent=1 // pred_fallthru
      _
    // Predicated region
    $region26: #{tpu_custom_call.1} parent=1 // pred_check
      _
    $region27: #{tpu_custom_call.1} parent=1 // pred_check_branch
      %47 = sbr.rel (0) target = $region29
    $region28: #{tpu_custom_call.1} parent=1 // pred_region
      %48 = dma.done [#allocation5], 2048
    $region29: #{tpu_custom_call.1} parent=1 // pred_fallthru
      _
    // Predicated region
    $region30: #{tpu_custom_call.1} parent=1 // pred_check
      _
    $region31: #{tpu_custom_call.1} parent=1 // pred_check_branch
      %50 = sbr.rel (0) target = $region33
    $region32: #{tpu_custom_call.1} parent=1 // pred_region
      %51 = dma.done [#allocation8], 1024
    $region33: #{tpu_custom_call.1} parent=1 // pred_fallthru
      _
    %v52 = vld [vmem:[%s0] sm:$0xff]
    %v53 = vld [vmem:[%s0 + $0x8] sm:$0xff]
    %v54 = vld [vmem:[%s0 + $0x10] sm:$0xff]
    %v55 = vld [vmem:[%s0 + $0x18] sm:$0xff]
    %v56 = vld [vmem:[%s0 + $0x20] sm:$0xff]
    %v57 = vld [vmem:[%s0 + $0x28] sm:$0xff]
    %v58 = vld [vmem:[%s0 + $0x30] sm:$0xff]
    %v59 = vld [vmem:[%s0 + $0x38] sm:$0xff]
    %v60 = vld [vmem:[%s1] sm:$0xff]
    %v61 = vld [vmem:[%s1 + $0x8] sm:$0xff]
    %v62 = vld [vmem:[%s1 + $0x10] sm:$0xff]
    %v63 = vld [vmem:[%s1 + $0x18] sm:$0xff]
    %v64 = vld [vmem:[%s1 + $0x20] sm:$0xff]
    %v65 = vld [vmem:[%s1 + $0x28] sm:$0xff]
    %v66 = vld [vmem:[%s1 + $0x30] sm:$0xff]
    %v67 = vld [vmem:[%s1 + $0x38] sm:$0xff]
    %v68 = vld [vmem:[%s3] sm:$0x3]
    %v70 = vlaneseq
    %v71 = vshrl.u32 %v70, 7
    %v72 = vsub.s32 0, %v71
    %v73 = vrot.slane %v68, %v72
    %v74 = vlaneseq
    %v75 = vshrl.u32 %v74, 7
    %v76 = vsub.s32 1, %v75
    %v77 = vrot.slane %v68, %v76
    %vm80 = vcmask 261120
    %v82 = vsel %vm80, %v52, 0
    %v85 = vsel %vm80, %v53, 0
    %v88 = vsel %vm80, %v54, 0
    %v91 = vsel %vm80, %v55, 0
    %v94 = vsel %vm80, %v56, 0
    %v97 = vsel %vm80, %v57, 0
    %v100 = vsel %vm80, %v58, 0
    %v103 = vsel %vm80, %v59, 0
    %105 = vmatprep.subr.mxu0 0.0
    %106 = vmatpush1.msra.mxu0 0.0
    %107 = vmatprep.subr.mxu0 0.0
    %108 = vmatpush1.msra.mxu0 0.0
    %109 = vmatprep.subr.mxu0 0.0
    %110 = vmatpush1.msra.mxu0 0.0
    %111 = vmatprep.subr.mxu0 0.0
    %112 = vmatpush1.msra.mxu0 0.0
    %113 = vmatprep.subr.mxu0 0.0
    %114 = vmatpush1.msra.mxu0 0.0
    %115 = vmatprep.subr.mxu0 0.0
    %116 = vmatpush1.msra.mxu0 0.0
    %117 = vmatprep.subr.mxu0 0.0
    %118 = vmatpush1.msra.mxu0 0.0
    %119 = vmatprep.subr.mxu0 0.0
    %120 = vmatpush1.msra.mxu0 0.0
    %121 = vmatprep.subr.mxu0 0.0
    %122 = vmatpush1.msra.mxu0 0.0
    %123 = vmatprep.subr.mxu0 0.0
    %124 = vmatpush1.msra.mxu0 0.0
    %125 = vmatprep.subr.mxu0 0.0
    %126 = vmatpush1.msra.mxu0 0.0
    %127 = vmatprep.subr.mxu0 0.0
    %128 = vmatpush1.msra.mxu0 0.0
    %129 = vmatprep.subr.mxu0 %v67
    %130 = vmatpush1.msra.mxu0 %v66
    %131 = vmatprep.subr.mxu0 %v65
    %132 = vmatpush1.msra.mxu0 %v64
    %133 = vmatprep.subr.mxu0 %v63
    %134 = vmatpush1.msra.mxu0 %v62
    %135 = vmatprep.subr.mxu0 %v61
    %136 = vmatpush1.msra.mxu0 %v60
    %137 = vmatprep.subr.mxu0 0.0
    %138 = vmatpush2.msra.mxu0 0.0
    %139 = vmatprep.subr.mxu0 0.0
    %140 = vmatpush2.msra.mxu0 0.0
    %141 = vmatprep.subr.mxu0 0.0
    %142 = vmatpush2.msra.mxu0 0.0
    %143 = vmatprep.subr.mxu0 0.0
    %144 = vmatpush2.msra.mxu0 0.0
    %145 = vmatprep.subr.mxu0 0.0
    %146 = vmatpush2.msra.mxu0 0.0
    %147 = vmatprep.subr.mxu0 0.0
    %148 = vmatpush2.msra.mxu0 0.0
    %149 = vmatprep.subr.mxu0 0.0
    %150 = vmatpush2.msra.mxu0 0.0
    %151 = vmatprep.subr.mxu0 0.0
    %152 = vmatpush2.msra.mxu0 0.0
    %153 = vmatprep.subr.mxu0 0.0
    %154 = vmatpush2.msra.mxu0 0.0
    %155 = vmatprep.subr.mxu0 0.0
    %156 = vmatpush2.msra.mxu0 0.0
    %157 = vmatprep.subr.mxu0 0.0
    %158 = vmatpush2.msra.mxu0 0.0
    %159 = vmatprep.subr.mxu0 0.0
    %160 = vmatpush2.msra.mxu0 0.0
    %161 = vmatprep.subr.mxu0 0.0
    %162 = vmatpush2.msra.mxu0 0.0
    %163 = vmatprep.subr.mxu0 0.0
    %164 = vmatpush2.msra.mxu0 0.0
    %165 = vmatprep.subr.mxu0 0.0
    %166 = vmatpush2.msra.mxu0 0.0
    %167 = vmatprep.subr.mxu0 0.0
    %168 = vmatpush2.msra.mxu0 0.0
    %169 = vmatprep.mubr.f32.mxu0 0.0
    %170 = vmatmul.mubr.f32.gmra.mxu0 %v82
    %v171 = vpop.f32.mrf.mxu0
    %v172 = vadd.f32 %v73, %v171
    %v173 = vpop.f32.mrf.mxu0
    %v174 = vadd.f32 %v77, %v173
    %175 = vmatprep.mubr.f32.mxu0 0.0
    %176 = vmatmul.mubr.f32.gmra.mxu0 %v85
    %v177 = vpop.f32.mrf.mxu0
    %v178 = vadd.f32 %v73, %v177
    %v179 = vpop.f32.mrf.mxu0
    %v180 = vadd.f32 %v77, %v179
    %181 = vmatprep.mubr.f32.mxu0 0.0
    %182 = vmatmul.mubr.f32.gmra.mxu0 %v88
    %v183 = vpop.f32.mrf.mxu0
    %v184 = vadd.f32 %v73, %v183
    %v185 = vpop.f32.mrf.mxu0
    %v186 = vadd.f32 %v77, %v185
    %187 = vmatprep.mubr.f32.mxu0 0.0
    %188 = vmatmul.mubr.f32.gmra.mxu0 %v91
    %v189 = vpop.f32.mrf.mxu0
    %v190 = vadd.f32 %v73, %v189
    %v191 = vpop.f32.mrf.mxu0
    %v192 = vadd.f32 %v77, %v191
    %193 = vmatprep.mubr.f32.mxu0 0.0
    %194 = vmatmul.mubr.f32.gmra.mxu0 %v94
    %v195 = vpop.f32.mrf.mxu0
    %v196 = vadd.f32 %v73, %v195
    %v197 = vpop.f32.mrf.mxu0
    %v198 = vadd.f32 %v77, %v197
    %199 = vmatprep.mubr.f32.mxu0 0.0
    %200 = vmatmul.mubr.f32.gmra.mxu0 %v97
    %v201 = vpop.f32.mrf.mxu0
    %v202 = vadd.f32 %v73, %v201
    %v203 = vpop.f32.mrf.mxu0
    %v204 = vadd.f32 %v77, %v203
    %205 = vmatprep.mubr.f32.mxu0 0.0
    %206 = vmatmul.mubr.f32.gmra.mxu0 %v100
    %v207 = vpop.f32.mrf.mxu0
    %v208 = vadd.f32 %v73, %v207
    %v209 = vpop.f32.mrf.mxu0
    %v210 = vadd.f32 %v77, %v209
    %211 = vmatprep.mubr.f32.mxu0 0.0
    %212 = vmatmul.mubr.f32.gmra.mxu0 %v103
    %v213 = vpop.f32.mrf.mxu0
    %v214 = vadd.f32 %v73, %v213
    %v215 = vpop.f32.mrf.mxu0
    %v216 = vadd.f32 %v77, %v215
    %217 = vdwg.mxu0
    %218 = vst [vmem:[#allocation2] sm:$0xff] %v172
    %219 = vst [vmem:[#allocation2 + $0x8] sm:$0xff] %v174
    %220 = vst [vmem:[#allocation2 + $0x10] sm:$0xff] %v178
    %221 = vst [vmem:[#allocation2 + $0x18] sm:$0xff] %v180
    %222 = vst [vmem:[#allocation2 + $0x20] sm:$0xff] %v184
    %223 = vst [vmem:[#allocation2 + $0x28] sm:$0xff] %v186
    %224 = vst [vmem:[#allocation2 + $0x30] sm:$0xff] %v190
    %225 = vst [vmem:[#allocation2 + $0x38] sm:$0xff] %v192
    %226 = vst [vmem:[#allocation2 + $0x40] sm:$0xff] %v196
    %227 = vst [vmem:[#allocation2 + $0x48] sm:$0xff] %v198
    %228 = vst [vmem:[#allocation2 + $0x50] sm:$0xff] %v202
    %229 = vst [vmem:[#allocation2 + $0x58] sm:$0xff] %v204
    %230 = vst [vmem:[#allocation2 + $0x60] sm:$0xff] %v208
    %231 = vst [vmem:[#allocation2 + $0x68] sm:$0xff] %v210
    %232 = vst [vmem:[#allocation2 + $0x70] sm:$0xff] %v214
    %233 = vst [vmem:[#allocation2 + $0x78] sm:$0xff] %v216
    %v234 = vld [vmem:[#allocation4] sm:$0xff]
    %v235 = vld [vmem:[#allocation4 + $0x8] sm:$0xff]
    %v236 = vld [vmem:[#allocation4 + $0x10] sm:$0xff]
    %v237 = vld [vmem:[#allocation4 + $0x18] sm:$0xff]
    %v238 = vld [vmem:[#allocation4 + $0x20] sm:$0xff]
    %v239 = vld [vmem:[#allocation4 + $0x28] sm:$0xff]
    %v240 = vld [vmem:[#allocation4 + $0x30] sm:$0xff]
    %v241 = vld [vmem:[#allocation4 + $0x38] sm:$0xff]
    %v242 = vld [vmem:[#allocation4 + $0x40] sm:$0xff]
    %v243 = vld [vmem:[#allocation4 + $0x48] sm:$0xff]
    %v244 = vld [vmem:[#allocation4 + $0x50] sm:$0xff]
    %v245 = vld [vmem:[#allocation4 + $0x58] sm:$0xff]
    %v246 = vld [vmem:[#allocation4 + $0x60] sm:$0xff]
    %v247 = vld [vmem:[#allocation4 + $0x68] sm:$0xff]
    %v248 = vld [vmem:[#allocation4 + $0x70] sm:$0xff]
    %v249 = vld [vmem:[#allocation4 + $0x78] sm:$0xff]
    %s250 = smul.u32 0, 2
    %s251 = smul.addr %s250, 8
    %s252 = scalar_lea.vmem [#allocation2], %s251
    %v253 = vld [vmem:[%s252] sm:$0xff]
    %s254 = smul.u32 7, 2
    %s255 = smul.addr %s254, 8
    %s256 = scalar_lea.vmem [#allocation2], %s255
    %v257 = vld [vmem:[%s256 + $0x8] sm:$0xff]
    %vm258 = vcmask 523264
    %v260 = vsel %vm258, 0.0, 0
    %262 = vmatprep.subr.mxu0 0.0
    %263 = vmatpush1.msra.mxu0 0.0
    %264 = vmatprep.subr.mxu0 0.0
    %265 = vmatpush1.msra.mxu0 0.0
    %266 = vmatprep.subr.mxu0 0.0
    %267 = vmatpush1.msra.mxu0 0.0
    %268 = vmatprep.subr.mxu0 0.0
    %269 = vmatpush1.msra.mxu0 0.0
    %270 = vmatprep.subr.mxu0 0.0
    %271 = vmatpush1.msra.mxu0 0.0
    %272 = vmatprep.subr.mxu0 0.0
    %273 = vmatpush1.msra.mxu0 0.0
    %274 = vmatprep.subr.mxu0 0.0
    %275 = vmatpush1.msra.mxu0 0.0
    %276 = vmatprep.subr.mxu0 0.0
    %277 = vmatpush1.msra.mxu0 0.0
    %278 = vmatprep.subr.mxu0 %v249
    %279 = vmatpush1.msra.mxu0 %v248
    %280 = vmatprep.subr.mxu0 %v247
    %281 = vmatpush1.msra.mxu0 %v246
    %282 = vmatprep.subr.mxu0 %v245
    %283 = vmatpush1.msra.mxu0 %v244
    %284 = vmatprep.subr.mxu0 %v243
    %285 = vmatpush1.msra.mxu0 %v242
    %286 = vmatprep.subr.mxu0 %v241
    %287 = vmatpush1.msra.mxu0 %v240
    %288 = vmatprep.subr.mxu0 %v239
    %289 = vmatpush1.msra.mxu0 %v238
    %290 = vmatprep.subr.mxu0 %v237
    %291 = vmatpush1.msra.mxu0 %v236
    %292 = vmatprep.subr.mxu0 %v235
    %293 = vmatpush1.msra.mxu0 %v234
    %294 = vmatprep.subr.mxu0 0.0
    %295 = vmatpush2.msra.mxu0 0.0
    %296 = vmatprep.subr.mxu0 0.0
    %297 = vmatpush2.msra.mxu0 0.0
    %298 = vmatprep.subr.mxu0 0.0
    %299 = vmatpush2.msra.mxu0 0.0
    %300 = vmatprep.subr.mxu0 0.0
    %301 = vmatpush2.msra.mxu0 0.0
    %302 = vmatprep.subr.mxu0 0.0
    %303 = vmatpush2.msra.mxu0 0.0
    %304 = vmatprep.subr.mxu0 0.0
    %305 = vmatpush2.msra.mxu0 0.0
    %306 = vmatprep.subr.mxu0 0.0
    %307 = vmatpush2.msra.mxu0 0.0
    %308 = vmatprep.subr.mxu0 0.0
    %309 = vmatpush2.msra.mxu0 0.0
    %310 = vmatprep.subr.mxu0 0.0
    %311 = vmatpush2.msra.mxu0 0.0
    %312 = vmatprep.subr.mxu0 0.0
    %313 = vmatpush2.msra.mxu0 0.0
    %314 = vmatprep.subr.mxu0 0.0
    %315 = vmatpush2.msra.mxu0 0.0
    %316 = vmatprep.subr.mxu0 0.0
    %317 = vmatpush2.msra.mxu0 0.0
    %318 = vmatprep.subr.mxu0 0.0
    %319 = vmatpush2.msra.mxu0 0.0
    %320 = vmatprep.subr.mxu0 0.0
    %321 = vmatpush2.msra.mxu0 0.0
    %322 = vmatprep.subr.mxu0 0.0
    %323 = vmatpush2.msra.mxu0 0.0
    %324 = vmatprep.subr.mxu0 0.0
    %325 = vmatpush2.msra.mxu0 0.0
    %326 = vmatprep.mubr.f32.mxu0 0.0
    %327 = vmatmul.mubr.f32.gmra.mxu0 %v260
    %v328 = vpop.f32.mrf.mxu0
    %v329 = vadd.f32 %v253, %v328
    %v330 = vpop.f32.mrf.mxu0
    %v331 = vadd.f32 %v257, %v330
    %332 = vdwg.mxu0
    %v333 = vxor.u32 %v329, 2147483648
    %v334 = vxor.u32 %v331, 2147483648
    %v335 = vmul.f32 %v333, 1.442695
    %v336 = vpow.pop %v335
    %v337 = vmul.f32 %v334, 1.442695
    %v338 = vpow.pop %v337
    %v339 = vadd.f32 %v336, 1.0
    %v340 = vadd.f32 %v338, 1.0
    %v341 = vrcp.pop %v339
    %v342 = vmul.f32 1.0, %v341
    %v343 = vrcp.pop %v340
    %v344 = vmul.f32 1.0, %v343
    %v345 = vmul.f32 %v342, 2.0
    %v346 = vsub.f32 %v345, 1.0
    %v347 = vmul.f32 %v344, 2.0
    %v348 = vsub.f32 %v347, 1.0
    %v349 = vmul.f32 %v342, 0.0
    %351 = vrot.lane.b32.xlu0 %v346, 64
    %v352 = vpop.permute.xlu0 %351
    %v354 = vmul.f32 %v342, %v352
    %356 = vrot.lane.b32.xlu0 %v354, 32
    %v357 = vpop.permute.xlu0 %356
    %v359 = vadd.f32 %v349, %v357
    %v360 = vmul.f32 %v344, 0.0
    %362 = vrot.lane.b32.xlu0 %v348, 64
    %v363 = vpop.permute.xlu0 %362
    %v365 = vmul.f32 %v344, %v363
    %367 = vrot.lane.b32.xlu0 %v365, 32
    %v368 = vpop.permute.xlu0 %367
    %v370 = vadd.f32 %v360, %v368
    %372 = vrot.lane.b32.xlu0 %v359, 96
    %v373 = vpop.permute.xlu0 %372
    %v375 = vsel %vm80, %v373, %v370
    %v376 = vtanh.pop %v375
    %378 = vrot.lane.b32.xlu0 %v342, 32
    %v379 = vpop.permute.xlu0 %378
    %382 = vrot.lane.b32.xlu0 %v344, 64
    %v383 = vpop.permute.xlu0 %382
    %v385 = vsel %vm80, %v379, %v383
    %v386 = vmul.f32 %v385, %v376
    %387 = vst.msk [vmem:[#allocation3] sm:$0xff] %vm80, %v386
    %s388 = scalar_lea.vmem [#allocation3], 56
    %vm389 = vcmask 523520
    %390 = vst.msk [vmem:[%s388] sm:$0xff] %vm389, %v386
    %s391 = smul.u32 1, 2
    %s392 = smul.addr %s391, 8
    %s393 = scalar_lea.vmem [#allocation2], %s392
    %v394 = vld [vmem:[%s393] sm:$0xff]
    %s395 = smul.u32 6, 2
    %s396 = smul.addr %s395, 8
    %s397 = scalar_lea.vmem [#allocation2], %s396
    %v398 = vld [vmem:[%s397 + $0x8] sm:$0xff]
    %v400 = vsel %vm258, %v386, 0
    %402 = vmatprep.subr.mxu0 0.0
    %403 = vmatpush1.msra.mxu0 0.0
    %404 = vmatprep.subr.mxu0 0.0
    %405 = vmatpush1.msra.mxu0 0.0
    %406 = vmatprep.subr.mxu0 0.0
    %407 = vmatpush1.msra.mxu0 0.0
    %408 = vmatprep.subr.mxu0 0.0
    %409 = vmatpush1.msra.mxu0 0.0
    %410 = vmatprep.subr.mxu0 0.0
    %411 = vmatpush1.msra.mxu0 0.0
    %412 = vmatprep.subr.mxu0 0.0
    %413 = vmatpush1.msra.mxu0 0.0
    %414 = vmatprep.subr.mxu0 0.0
    %415 = vmatpush1.msra.mxu0 0.0
    %416 = vmatprep.subr.mxu0 0.0
    %417 = vmatpush1.msra.mxu0 0.0
    %418 = vmatprep.subr.mxu0 %v249
    %419 = vmatpush1.msra.mxu0 %v248
    %420 = vmatprep.subr.mxu0 %v247
    %421 = vmatpush1.msra.mxu0 %v246
    %422 = vmatprep.subr.mxu0 %v245
    %423 = vmatpush1.msra.mxu0 %v244
    %424 = vmatprep.subr.mxu0 %v243
    %425 = vmatpush1.msra.mxu0 %v242
    %426 = vmatprep.subr.mxu0 %v241
    %427 = vmatpush1.msra.mxu0 %v240
    %428 = vmatprep.subr.mxu0 %v239
    %429 = vmatpush1.msra.mxu0 %v238
    %430 = vmatprep.subr.mxu0 %v237
    %431 = vmatpush1.msra.mxu0 %v236
    %432 = vmatprep.subr.mxu0 %v235
    %433 = vmatpush1.msra.mxu0 %v234
    %434 = vmatprep.subr.mxu0 0.0
    %435 = vmatpush2.msra.mxu0 0.0
    %436 = vmatprep.subr.mxu0 0.0
    %437 = vmatpush2.msra.mxu0 0.0
    %438 = vmatprep.subr.mxu0 0.0
    %439 = vmatpush2.msra.mxu0 0.0
    %440 = vmatprep.subr.mxu0 0.0
    %441 = vmatpush2.msra.mxu0 0.0
    %442 = vmatprep.subr.mxu0 0.0
    %443 = vmatpush2.msra.mxu0 0.0
    %444 = vmatprep.subr.mxu0 0.0
    %445 = vmatpush2.msra.mxu0 0.0
    %446 = vmatprep.subr.mxu0 0.0
    %447 = vmatpush2.msra.mxu0 0.0
    %448 = vmatprep.subr.mxu0 0.0
    %449 = vmatpush2.msra.mxu0 0.0
    %450 = vmatprep.subr.mxu0 0.0
    %451 = vmatpush2.msra.mxu0 0.0
    %452 = vmatprep.subr.mxu0 0.0
    %453 = vmatpush2.msra.mxu0 0.0
    %454 = vmatprep.subr.mxu0 0.0
    %455 = vmatpush2.msra.mxu0 0.0
    %456 = vmatprep.subr.mxu0 0.0
    %457 = vmatpush2.msra.mxu0 0.0
    %458 = vmatprep.subr.mxu0 0.0
    %459 = vmatpush2.msra.mxu0 0.0
    %460 = vmatprep.subr.mxu0 0.0
    %461 = vmatpush2.msra.mxu0 0.0
    %462 = vmatprep.subr.mxu0 0.0
    %463 = vmatpush2.msra.mxu0 0.0
    %464 = vmatprep.subr.mxu0 0.0
    %465 = vmatpush2.msra.mxu0 0.0
    %466 = vmatprep.mubr.f32.mxu0 0.0
    %467 = vmatmul.mubr.f32.gmra.mxu0 %v400
    %v468 = vpop.f32.mrf.mxu0
    %v469 = vadd.f32 %v394, %v468
    %v470 = vpop.f32.mrf.mxu0
    %v471 = vadd.f32 %v398, %v470
    %472 = vdwg.mxu0
    %v473 = vxor.u32 %v469, 2147483648
    %v474 = vxor.u32 %v471, 2147483648
    %v475 = vmul.f32 %v473, 1.442695
    %v476 = vpow.pop %v475
    %v477 = vmul.f32 %v474, 1.442695
    %v478 = vpow.pop %v477
    %v479 = vadd.f32 %v476, 1.0
    %v480 = vadd.f32 %v478, 1.0
    %v481 = vrcp.pop %v479
    %v482 = vmul.f32 1.0, %v481
    %v483 = vrcp.pop %v480
    %v484 = vmul.f32 1.0, %v483
    %v485 = vmul.f32 %v482, 2.0
    %v486 = vsub.f32 %v485, 1.0
    %v487 = vmul.f32 %v484, 2.0
    %v488 = vsub.f32 %v487, 1.0
    %v489 = vmul.f32 %v482, %v359
    %491 = vrot.lane.b32.xlu0 %v486, 64
    %v492 = vpop.permute.xlu0 %491
    %v494 = vmul.f32 %v482, %v492
    %496 = vrot.lane.b32.xlu0 %v494, 32
    %v497 = vpop.permute.xlu0 %496
    %v499 = vadd.f32 %v489, %v497
    %v500 = vmul.f32 %v484, %v370
    %502 = vrot.lane.b32.xlu0 %v488, 64
    %v503 = vpop.permute.xlu0 %502
    %v505 = vmul.f32 %v484, %v503
    %507 = vrot.lane.b32.xlu0 %v505, 32
    %v508 = vpop.permute.xlu0 %507
    %v510 = vadd.f32 %v500, %v508
    %512 = vrot.lane.b32.xlu0 %v499, 96
    %v513 = vpop.permute.xlu0 %512
    %v515 = vsel %vm80, %v513, %v510
    %v516 = vtanh.pop %v515
    %518 = vrot.lane.b32.xlu0 %v482, 32
    %v519 = vpop.permute.xlu0 %518
    %522 = vrot.lane.b32.xlu0 %v484, 64
    %v523 = vpop.permute.xlu0 %522
    %v525 = vsel %vm80, %v519, %v523
    %v526 = vmul.f32 %v525, %v516
    %s527 = scalar_lea.vmem [#allocation3], 8
    %528 = vst.msk [vmem:[%s527] sm:$0xff] %vm80, %v526
    %s529 = scalar_lea.vmem [#allocation3], 48
    %530 = vst.msk [vmem:[%s529] sm:$0xff] %vm389, %v526
    %s531 = smul.u32 2, 2
    %s532 = smul.addr %s531, 8
    %s533 = scalar_lea.vmem [#allocation2], %s532
    %v534 = vld [vmem:[%s533] sm:$0xff]
    %s535 = smul.u32 5, 2
    %s536 = smul.addr %s535, 8
    %s537 = scalar_lea.vmem [#allocation2], %s536
    %v538 = vld [vmem:[%s537 + $0x8] sm:$0xff]
    %v540 = vsel %vm258, %v526, 0
    %542 = vmatprep.subr.mxu0 0.0
    %543 = vmatpush1.msra.mxu0 0.0
    %544 = vmatprep.subr.mxu0 0.0
    %545 = vmatpush1.msra.mxu0 0.0
    %546 = vmatprep.subr.mxu0 0.0
    %547 = vmatpush1.msra.mxu0 0.0
    %548 = vmatprep.subr.mxu0 0.0
    %549 = vmatpush1.msra.mxu0 0.0
    %550 = vmatprep.subr.mxu0 0.0
    %551 = vmatpush1.msra.mxu0 0.0
    %552 = vmatprep.subr.mxu0 0.0
    %553 = vmatpush1.msra.mxu0 0.0
    %554 = vmatprep.subr.mxu0 0.0
    %555 = vmatpush1.msra.mxu0 0.0
    %556 = vmatprep.subr.mxu0 0.0
    %557 = vmatpush1.msra.mxu0 0.0
    %558 = vmatprep.subr.mxu0 %v249
    %559 = vmatpush1.msra.mxu0 %v248
    %560 = vmatprep.subr.mxu0 %v247
    %561 = vmatpush1.msra.mxu0 %v246
    %562 = vmatprep.subr.mxu0 %v245
    %563 = vmatpush1.msra.mxu0 %v244
    %564 = vmatprep.subr.mxu0 %v243
    %565 = vmatpush1.msra.mxu0 %v242
    %566 = vmatprep.subr.mxu0 %v241
    %567 = vmatpush1.msra.mxu0 %v240
    %568 = vmatprep.subr.mxu0 %v239
    %569 = vmatpush1.msra.mxu0 %v238
    %570 = vmatprep.subr.mxu0 %v237
    %571 = vmatpush1.msra.mxu0 %v236
    %572 = vmatprep.subr.mxu0 %v235
    %573 = vmatpush1.msra.mxu0 %v234
    %574 = vmatprep.subr.mxu0 0.0
    %575 = vmatpush2.msra.mxu0 0.0
    %576 = vmatprep.subr.mxu0 0.0
    %577 = vmatpush2.msra.mxu0 0.0
    %578 = vmatprep.subr.mxu0 0.0
    %579 = vmatpush2.msra.mxu0 0.0
    %580 = vmatprep.subr.mxu0 0.0
    %581 = vmatpush2.msra.mxu0 0.0
    %582 = vmatprep.subr.mxu0 0.0
    %583 = vmatpush2.msra.mxu0 0.0
    %584 = vmatprep.subr.mxu0 0.0
    %585 = vmatpush2.msra.mxu0 0.0
    %586 = vmatprep.subr.mxu0 0.0
    %587 = vmatpush2.msra.mxu0 0.0
    %588 = vmatprep.subr.mxu0 0.0
    %589 = vmatpush2.msra.mxu0 0.0
    %590 = vmatprep.subr.mxu0 0.0
    %591 = vmatpush2.msra.mxu0 0.0
    %592 = vmatprep.subr.mxu0 0.0
    %593 = vmatpush2.msra.mxu0 0.0
    %594 = vmatprep.subr.mxu0 0.0
    %595 = vmatpush2.msra.mxu0 0.0
    %596 = vmatprep.subr.mxu0 0.0
    %597 = vmatpush2.msra.mxu0 0.0
    %598 = vmatprep.subr.mxu0 0.0
    %599 = vmatpush2.msra.mxu0 0.0
    %600 = vmatprep.subr.mxu0 0.0
    %601 = vmatpush2.msra.mxu0 0.0
    %602 = vmatprep.subr.mxu0 0.0
    %603 = vmatpush2.msra.mxu0 0.0
    %604 = vmatprep.subr.mxu0 0.0
    %605 = vmatpush2.msra.mxu0 0.0
    %606 = vmatprep.mubr.f32.mxu0 0.0
    %607 = vmatmul.mubr.f32.gmra.mxu0 %v540
    %v608 = vpop.f32.mrf.mxu0
    %v609 = vadd.f32 %v534, %v608
    %v610 = vpop.f32.mrf.mxu0
    %v611 = vadd.f32 %v538, %v610
    %612 = vdwg.mxu0
    %v613 = vxor.u32 %v609, 2147483648
    %v614 = vxor.u32 %v611, 2147483648
    %v615 = vmul.f32 %v613, 1.442695
    %v616 = vpow.pop %v615
    %v617 = vmul.f32 %v614, 1.442695
    %v618 = vpow.pop %v617
    %v619 = vadd.f32 %v616, 1.0
    %v620 = vadd.f32 %v618, 1.0
    %v621 = vrcp.pop %v619
    %v622 = vmul.f32 1.0, %v621
    %v623 = vrcp.pop %v620
    %v624 = vmul.f32 1.0, %v623
    %v625 = vmul.f32 %v622, 2.0
    %v626 = vsub.f32 %v625, 1.0
    %v627 = vmul.f32 %v624, 2.0
    %v628 = vsub.f32 %v627, 1.0
    %v629 = vmul.f32 %v622, %v499
    %631 = vrot.lane.b32.xlu0 %v626, 64
    %v632 = vpop.permute.xlu0 %631
    %v634 = vmul.f32 %v622, %v632
    %636 = vrot.lane.b32.xlu0 %v634, 32
    %v637 = vpop.permute.xlu0 %636
    %v639 = vadd.f32 %v629, %v637
    %v640 = vmul.f32 %v624, %v510
    %642 = vrot.lane.b32.xlu0 %v628, 64
    %v643 = vpop.permute.xlu0 %642
    %v645 = vmul.f32 %v624, %v643
    %647 = vrot.lane.b32.xlu0 %v645, 32
    %v648 = vpop.permute.xlu0 %647
    %v650 = vadd.f32 %v640, %v648
    %652 = vrot.lane.b32.xlu0 %v639, 96
    %v653 = vpop.permute.xlu0 %652
    %v655 = vsel %vm80, %v653, %v650
    %v656 = vtanh.pop %v655
    %658 = vrot.lane.b32.xlu0 %v622, 32
    %v659 = vpop.permute.xlu0 %658
    %662 = vrot.lane.b32.xlu0 %v624, 64
    %v663 = vpop.permute.xlu0 %662
    %v665 = vsel %vm80, %v659, %v663
    %v666 = vmul.f32 %v665, %v656
    %s667 = scalar_lea.vmem [#allocation3], 16
    %668 = vst.msk [vmem:[%s667] sm:$0xff] %vm80, %v666
    %s669 = scalar_lea.vmem [#allocation3], 40
    %670 = vst.msk [vmem:[%s669] sm:$0xff] %vm389, %v666
    %s671 = smul.u32 3, 2
    %s672 = smul.addr %s671, 8
    %s673 = scalar_lea.vmem [#allocation2], %s672
    %v674 = vld [vmem:[%s673] sm:$0xff]
    %s675 = smul.u32 4, 2
    %s676 = smul.addr %s675, 8
    %s677 = scalar_lea.vmem [#allocation2], %s676
    %v678 = vld [vmem:[%s677 + $0x8] sm:$0xff]
    %v680 = vsel %vm258, %v666, 0
    %682 = vmatprep.subr.mxu0 0.0
    %683 = vmatpush1.msra.mxu0 0.0
    %684 = vmatprep.subr.mxu0 0.0
    %685 = vmatpush1.msra.mxu0 0.0
    %686 = vmatprep.subr.mxu0 0.0
    %687 = vmatpush1.msra.mxu0 0.0
    %688 = vmatprep.subr.mxu0 0.0
    %689 = vmatpush1.msra.mxu0 0.0
    %690 = vmatprep.subr.mxu0 0.0
    %691 = vmatpush1.msra.mxu0 0.0
    %692 = vmatprep.subr.mxu0 0.0
    %693 = vmatpush1.msra.mxu0 0.0
    %694 = vmatprep.subr.mxu0 0.0
    %695 = vmatpush1.msra.mxu0 0.0
    %696 = vmatprep.subr.mxu0 0.0
    %697 = vmatpush1.msra.mxu0 0.0
    %698 = vmatprep.subr.mxu0 %v249
    %699 = vmatpush1.msra.mxu0 %v248
    %700 = vmatprep.subr.mxu0 %v247
    %701 = vmatpush1.msra.mxu0 %v246
    %702 = vmatprep.subr.mxu0 %v245
    %703 = vmatpush1.msra.mxu0 %v244
    %704 = vmatprep.subr.mxu0 %v243
    %705 = vmatpush1.msra.mxu0 %v242
    %706 = vmatprep.subr.mxu0 %v241
    %707 = vmatpush1.msra.mxu0 %v240
    %708 = vmatprep.subr.mxu0 %v239
    %709 = vmatpush1.msra.mxu0 %v238
    %710 = vmatprep.subr.mxu0 %v237
    %711 = vmatpush1.msra.mxu0 %v236
    %712 = vmatprep.subr.mxu0 %v235
    %713 = vmatpush1.msra.mxu0 %v234
    %714 = vmatprep.subr.mxu0 0.0
    %715 = vmatpush2.msra.mxu0 0.0
    %716 = vmatprep.subr.mxu0 0.0
    %717 = vmatpush2.msra.mxu0 0.0
    %718 = vmatprep.subr.mxu0 0.0
    %719 = vmatpush2.msra.mxu0 0.0
    %720 = vmatprep.subr.mxu0 0.0
    %721 = vmatpush2.msra.mxu0 0.0
    %722 = vmatprep.subr.mxu0 0.0
    %723 = vmatpush2.msra.mxu0 0.0
    %724 = vmatprep.subr.mxu0 0.0
    %725 = vmatpush2.msra.mxu0 0.0
    %726 = vmatprep.subr.mxu0 0.0
    %727 = vmatpush2.msra.mxu0 0.0
    %728 = vmatprep.subr.mxu0 0.0
    %729 = vmatpush2.msra.mxu0 0.0
    %730 = vmatprep.subr.mxu0 0.0
    %731 = vmatpush2.msra.mxu0 0.0
    %732 = vmatprep.subr.mxu0 0.0
    %733 = vmatpush2.msra.mxu0 0.0
    %734 = vmatprep.subr.mxu0 0.0
    %735 = vmatpush2.msra.mxu0 0.0
    %736 = vmatprep.subr.mxu0 0.0
    %737 = vmatpush2.msra.mxu0 0.0
    %738 = vmatprep.subr.mxu0 0.0
    %739 = vmatpush2.msra.mxu0 0.0
    %740 = vmatprep.subr.mxu0 0.0
    %741 = vmatpush2.msra.mxu0 0.0
    %742 = vmatprep.subr.mxu0 0.0
    %743 = vmatpush2.msra.mxu0 0.0
    %744 = vmatprep.subr.mxu0 0.0
    %745 = vmatpush2.msra.mxu0 0.0
    %746 = vmatprep.mubr.f32.mxu0 0.0
    %747 = vmatmul.mubr.f32.gmra.mxu0 %v680
    %v748 = vpop.f32.mrf.mxu0
    %v749 = vadd.f32 %v674, %v748
    %v750 = vpop.f32.mrf.mxu0
    %v751 = vadd.f32 %v678, %v750
    %752 = vdwg.mxu0
    %v753 = vxor.u32 %v749, 2147483648
    %v754 = vxor.u32 %v751, 2147483648
    %v755 = vmul.f32 %v753, 1.442695
    %v756 = vpow.pop %v755
    %v757 = vmul.f32 %v754, 1.442695
    %v758 = vpow.pop %v757
    %v759 = vadd.f32 %v756, 1.0
    %v760 = vadd.f32 %v758, 1.0
    %v761 = vrcp.pop %v759
    %v762 = vmul.f32 1.0, %v761
    %v763 = vrcp.pop %v760
    %v764 = vmul.f32 1.0, %v763
    %v765 = vmul.f32 %v762, 2.0
    %v766 = vsub.f32 %v765, 1.0
    %v767 = vmul.f32 %v764, 2.0
    %v768 = vsub.f32 %v767, 1.0
    %v769 = vmul.f32 %v762, %v639
    %771 = vrot.lane.b32.xlu0 %v766, 64
    %v772 = vpop.permute.xlu0 %771
    %v774 = vmul.f32 %v762, %v772
    %776 = vrot.lane.b32.xlu0 %v774, 32
    %v777 = vpop.permute.xlu0 %776
    %v779 = vadd.f32 %v769, %v777
    %v780 = vmul.f32 %v764, %v650
    %782 = vrot.lane.b32.xlu0 %v768, 64
    %v783 = vpop.permute.xlu0 %782
    %v785 = vmul.f32 %v764, %v783
    %787 = vrot.lane.b32.xlu0 %v785, 32
    %v788 = vpop.permute.xlu0 %787
    %v790 = vadd.f32 %v780, %v788
    %792 = vrot.lane.b32.xlu0 %v779, 96
    %v793 = vpop.permute.xlu0 %792
    %v795 = vsel %vm80, %v793, %v790
    %v796 = vtanh.pop %v795
    %798 = vrot.lane.b32.xlu0 %v762, 32
    %v799 = vpop.permute.xlu0 %798
    %802 = vrot.lane.b32.xlu0 %v764, 64
    %v803 = vpop.permute.xlu0 %802
    %v805 = vsel %vm80, %v799, %v803
    %v806 = vmul.f32 %v805, %v796
    %s807 = scalar_lea.vmem [#allocation3], 24
    %808 = vst.msk [vmem:[%s807] sm:$0xff] %vm80, %v806
    %s809 = scalar_lea.vmem [#allocation3], 32
    %810 = vst.msk [vmem:[%s809] sm:$0xff] %vm389, %v806
    %v811 = vld [vmem:[%s677] sm:$0xff]
    %v812 = vld [vmem:[%s673 + $0x8] sm:$0xff]
    %v814 = vsel %vm258, %v806, 0
    %816 = vmatprep.subr.mxu0 0.0
    %817 = vmatpush1.msra.mxu0 0.0
    %818 = vmatprep.subr.mxu0 0.0
    %819 = vmatpush1.msra.mxu0 0.0
    %820 = vmatprep.subr.mxu0 0.0
    %821 = vmatpush1.msra.mxu0 0.0
    %822 = vmatprep.subr.mxu0 0.0
    %823 = vmatpush1.msra.mxu0 0.0
    %824 = vmatprep.subr.mxu0 0.0
    %825 = vmatpush1.msra.mxu0 0.0
    %826 = vmatprep.subr.mxu0 0.0
    %827 = vmatpush1.msra.mxu0 0.0
    %828 = vmatprep.subr.mxu0 0.0
    %829 = vmatpush1.msra.mxu0 0.0
    %830 = vmatprep.subr.mxu0 0.0
    %831 = vmatpush1.msra.mxu0 0.0
    %832 = vmatprep.subr.mxu0 %v249
    %833 = vmatpush1.msra.mxu0 %v248
    %834 = vmatprep.subr.mxu0 %v247
    %835 = vmatpush1.msra.mxu0 %v246
    %836 = vmatprep.subr.mxu0 %v245
    %837 = vmatpush1.msra.mxu0 %v244
    %838 = vmatprep.subr.mxu0 %v243
    %839 = vmatpush1.msra.mxu0 %v242
    %840 = vmatprep.subr.mxu0 %v241
    %841 = vmatpush1.msra.mxu0 %v240
    %842 = vmatprep.subr.mxu0 %v239
    %843 = vmatpush1.msra.mxu0 %v238
    %844 = vmatprep.subr.mxu0 %v237
    %845 = vmatpush1.msra.mxu0 %v236
    %846 = vmatprep.subr.mxu0 %v235
    %847 = vmatpush1.msra.mxu0 %v234
    %848 = vmatprep.subr.mxu0 0.0
    %849 = vmatpush2.msra.mxu0 0.0
    %850 = vmatprep.subr.mxu0 0.0
    %851 = vmatpush2.msra.mxu0 0.0
    %852 = vmatprep.subr.mxu0 0.0
    %853 = vmatpush2.msra.mxu0 0.0
    %854 = vmatprep.subr.mxu0 0.0
    %855 = vmatpush2.msra.mxu0 0.0
    %856 = vmatprep.subr.mxu0 0.0
    %857 = vmatpush2.msra.mxu0 0.0
    %858 = vmatprep.subr.mxu0 0.0
    %859 = vmatpush2.msra.mxu0 0.0
    %860 = vmatprep.subr.mxu0 0.0
    %861 = vmatpush2.msra.mxu0 0.0
    %862 = vmatprep.subr.mxu0 0.0
    %863 = vmatpush2.msra.mxu0 0.0
    %864 = vmatprep.subr.mxu0 0.0
    %865 = vmatpush2.msra.mxu0 0.0
    %866 = vmatprep.subr.mxu0 0.0
    %867 = vmatpush2.msra.mxu0 0.0
    %868 = vmatprep.subr.mxu0 0.0
    %869 = vmatpush2.msra.mxu0 0.0
    %870 = vmatprep.subr.mxu0 0.0
    %871 = vmatpush2.msra.mxu0 0.0
    %872 = vmatprep.subr.mxu0 0.0
    %873 = vmatpush2.msra.mxu0 0.0
    %874 = vmatprep.subr.mxu0 0.0
    %875 = vmatpush2.msra.mxu0 0.0
    %876 = vmatprep.subr.mxu0 0.0
    %877 = vmatpush2.msra.mxu0 0.0
    %878 = vmatprep.subr.mxu0 0.0
    %879 = vmatpush2.msra.mxu0 0.0
    %880 = vmatprep.mubr.f32.mxu0 0.0
    %881 = vmatmul.mubr.f32.gmra.mxu0 %v814
    %v882 = vpop.f32.mrf.mxu0
    %v883 = vadd.f32 %v811, %v882
    %v884 = vpop.f32.mrf.mxu0
    %v885 = vadd.f32 %v812, %v884
    %886 = vdwg.mxu0
    %v887 = vxor.u32 %v883, 2147483648
    %v888 = vxor.u32 %v885, 2147483648
    %v889 = vmul.f32 %v887, 1.442695
    %v890 = vpow.pop %v889
    %v891 = vmul.f32 %v888, 1.442695
    %v892 = vpow.pop %v891
    %v893 = vadd.f32 %v890, 1.0
    %v894 = vadd.f32 %v892, 1.0
    %v895 = vrcp.pop %v893
    %v896 = vmul.f32 1.0, %v895
    %v897 = vrcp.pop %v894
    %v898 = vmul.f32 1.0, %v897
    %v899 = vmul.f32 %v896, 2.0
    %v900 = vsub.f32 %v899, 1.0
    %v901 = vmul.f32 %v898, 2.0
    %v902 = vsub.f32 %v901, 1.0
    %v903 = vmul.f32 %v896, %v779
    %905 = vrot.lane.b32.xlu0 %v900, 64
    %v906 = vpop.permute.xlu0 %905
    %v908 = vmul.f32 %v896, %v906
    %910 = vrot.lane.b32.xlu0 %v908, 32
    %v911 = vpop.permute.xlu0 %910
    %v913 = vadd.f32 %v903, %v911
    %v914 = vmul.f32 %v898, %v790
    %916 = vrot.lane.b32.xlu0 %v902, 64
    %v917 = vpop.permute.xlu0 %916
    %v919 = vmul.f32 %v898, %v917
    %921 = vrot.lane.b32.xlu0 %v919, 32
    %v922 = vpop.permute.xlu0 %921
    %v924 = vadd.f32 %v914, %v922
    %926 = vrot.lane.b32.xlu0 %v913, 96
    %v927 = vpop.permute.xlu0 %926
    %v929 = vsel %vm80, %v927, %v924
    %v930 = vtanh.pop %v929
    %932 = vrot.lane.b32.xlu0 %v896, 32
    %v933 = vpop.permute.xlu0 %932
    %936 = vrot.lane.b32.xlu0 %v898, 64
    %v937 = vpop.permute.xlu0 %936
    %v939 = vsel %vm80, %v933, %v937
    %v940 = vmul.f32 %v939, %v930
    %941 = vst.msk [vmem:[%s809] sm:$0xff] %vm80, %v940
    %942 = vst.msk [vmem:[%s807] sm:$0xff] %vm389, %v940
    %v943 = vld [vmem:[%s537] sm:$0xff]
    %v944 = vld [vmem:[%s533 + $0x8] sm:$0xff]
    %v946 = vsel %vm258, %v940, 0
    %948 = vmatprep.subr.mxu0 0.0
    %949 = vmatpush1.msra.mxu0 0.0
    %950 = vmatprep.subr.mxu0 0.0
    %951 = vmatpush1.msra.mxu0 0.0
    %952 = vmatprep.subr.mxu0 0.0
    %953 = vmatpush1.msra.mxu0 0.0
    %954 = vmatprep.subr.mxu0 0.0
    %955 = vmatpush1.msra.mxu0 0.0
    %956 = vmatprep.subr.mxu0 0.0
    %957 = vmatpush1.msra.mxu0 0.0
    %958 = vmatprep.subr.mxu0 0.0
    %959 = vmatpush1.msra.mxu0 0.0
    %960 = vmatprep.subr.mxu0 0.0
    %961 = vmatpush1.msra.mxu0 0.0
    %962 = vmatprep.subr.mxu0 0.0
    %963 = vmatpush1.msra.mxu0 0.0
    %964 = vmatprep.subr.mxu0 %v249
    %965 = vmatpush1.msra.mxu0 %v248
    %966 = vmatprep.subr.mxu0 %v247
    %967 = vmatpush1.msra.mxu0 %v246
    %968 = vmatprep.subr.mxu0 %v245
    %969 = vmatpush1.msra.mxu0 %v244
    %970 = vmatprep.subr.mxu0 %v243
    %971 = vmatpush1.msra.mxu0 %v242
    %972 = vmatprep.subr.mxu0 %v241
    %973 = vmatpush1.msra.mxu0 %v240
    %974 = vmatprep.subr.mxu0 %v239
    %975 = vmatpush1.msra.mxu0 %v238
    %976 = vmatprep.subr.mxu0 %v237
    %977 = vmatpush1.msra.mxu0 %v236
    %978 = vmatprep.subr.mxu0 %v235
    %979 = vmatpush1.msra.mxu0 %v234
    %980 = vmatprep.subr.mxu0 0.0
    %981 = vmatpush2.msra.mxu0 0.0
    %982 = vmatprep.subr.mxu0 0.0
    %983 = vmatpush2.msra.mxu0 0.0
    %984 = vmatprep.subr.mxu0 0.0
    %985 = vmatpush2.msra.mxu0 0.0
    %986 = vmatprep.subr.mxu0 0.0
    %987 = vmatpush2.msra.mxu0 0.0
    %988 = vmatprep.subr.mxu0 0.0
    %989 = vmatpush2.msra.mxu0 0.0
    %990 = vmatprep.subr.mxu0 0.0
    %991 = vmatpush2.msra.mxu0 0.0
    %992 = vmatprep.subr.mxu0 0.0
    %993 = vmatpush2.msra.mxu0 0.0
    %994 = vmatprep.subr.mxu0 0.0
    %995 = vmatpush2.msra.mxu0 0.0
    %996 = vmatprep.subr.mxu0 0.0
    %997 = vmatpush2.msra.mxu0 0.0
    %998 = vmatprep.subr.mxu0 0.0
    %999 = vmatpush2.msra.mxu0 0.0
    %1000 = vmatprep.subr.mxu0 0.0
    %1001 = vmatpush2.msra.mxu0 0.0
    %1002 = vmatprep.subr.mxu0 0.0
    %1003 = vmatpush2.msra.mxu0 0.0
    %1004 = vmatprep.subr.mxu0 0.0
    %1005 = vmatpush2.msra.mxu0 0.0
    %1006 = vmatprep.subr.mxu0 0.0
    %1007 = vmatpush2.msra.mxu0 0.0
    %1008 = vmatprep.subr.mxu0 0.0
    %1009 = vmatpush2.msra.mxu0 0.0
    %1010 = vmatprep.subr.mxu0 0.0
    %1011 = vmatpush2.msra.mxu0 0.0
    %1012 = vmatprep.mubr.f32.mxu0 0.0
    %1013 = vmatmul.mubr.f32.gmra.mxu0 %v946
    %v1014 = vpop.f32.mrf.mxu0
    %v1015 = vadd.f32 %v943, %v1014
    %v1016 = vpop.f32.mrf.mxu0
    %v1017 = vadd.f32 %v944, %v1016
    %1018 = vdwg.mxu0
    %v1019 = vxor.u32 %v1015, 2147483648
    %v1020 = vxor.u32 %v1017, 2147483648
    %v1021 = vmul.f32 %v1019, 1.442695
    %v1022 = vpow.pop %v1021
    %v1023 = vmul.f32 %v1020, 1.442695
    %v1024 = vpow.pop %v1023
    %v1025 = vadd.f32 %v1022, 1.0
    %v1026 = vadd.f32 %v1024, 1.0
    %v1027 = vrcp.pop %v1025
    %v1028 = vmul.f32 1.0, %v1027
    %v1029 = vrcp.pop %v1026
    %v1030 = vmul.f32 1.0, %v1029
    %v1031 = vmul.f32 %v1028, 2.0
    %v1032 = vsub.f32 %v1031, 1.0
    %v1033 = vmul.f32 %v1030, 2.0
    %v1034 = vsub.f32 %v1033, 1.0
    %v1035 = vmul.f32 %v1028, %v913
    %1037 = vrot.lane.b32.xlu0 %v1032, 64
    %v1038 = vpop.permute.xlu0 %1037
    %v1040 = vmul.f32 %v1028, %v1038
    %1042 = vrot.lane.b32.xlu0 %v1040, 32
    %v1043 = vpop.permute.xlu0 %1042
    %v1045 = vadd.f32 %v1035, %v1043
    %v1046 = vmul.f32 %v1030, %v924
    %1048 = vrot.lane.b32.xlu0 %v1034, 64
    %v1049 = vpop.permute.xlu0 %1048
    %v1051 = vmul.f32 %v1030, %v1049
    %1053 = vrot.lane.b32.xlu0 %v1051, 32
    %v1054 = vpop.permute.xlu0 %1053
    %v1056 = vadd.f32 %v1046, %v1054
    %1058 = vrot.lane.b32.xlu0 %v1045, 96
    %v1059 = vpop.permute.xlu0 %1058
    %v1061 = vsel %vm80, %v1059, %v1056
    %v1062 = vtanh.pop %v1061
    %1064 = vrot.lane.b32.xlu0 %v1028, 32
    %v1065 = vpop.permute.xlu0 %1064
    %1068 = vrot.lane.b32.xlu0 %v1030, 64
    %v1069 = vpop.permute.xlu0 %1068
    %v1071 = vsel %vm80, %v1065, %v1069
    %v1072 = vmul.f32 %v1071, %v1062
    %1073 = vst.msk [vmem:[%s669] sm:$0xff] %vm80, %v1072
    %1074 = vst.msk [vmem:[%s667] sm:$0xff] %vm389, %v1072
    %v1075 = vld [vmem:[%s397] sm:$0xff]
    %v1076 = vld [vmem:[%s393 + $0x8] sm:$0xff]
    %v1078 = vsel %vm258, %v1072, 0
    %1080 = vmatprep.subr.mxu0 0.0
    %1081 = vmatpush1.msra.mxu0 0.0
    %1082 = vmatprep.subr.mxu0 0.0
    %1083 = vmatpush1.msra.mxu0 0.0
    %1084 = vmatprep.subr.mxu0 0.0
    %1085 = vmatpush1.msra.mxu0 0.0
    %1086 = vmatprep.subr.mxu0 0.0
    %1087 = vmatpush1.msra.mxu0 0.0
    %1088 = vmatprep.subr.mxu0 0.0
    %1089 = vmatpush1.msra.mxu0 0.0
    %1090 = vmatprep.subr.mxu0 0.0
    %1091 = vmatpush1.msra.mxu0 0.0
    %1092 = vmatprep.subr.mxu0 0.0
    %1093 = vmatpush1.msra.mxu0 0.0
    %1094 = vmatprep.subr.mxu0 0.0
    %1095 = vmatpush1.msra.mxu0 0.0
    %1096 = vmatprep.subr.mxu0 %v249
    %1097 = vmatpush1.msra.mxu0 %v248
    %1098 = vmatprep.subr.mxu0 %v247
    %1099 = vmatpush1.msra.mxu0 %v246
    %1100 = vmatprep.subr.mxu0 %v245
    %1101 = vmatpush1.msra.mxu0 %v244
    %1102 = vmatprep.subr.mxu0 %v243
    %1103 = vmatpush1.msra.mxu0 %v242
    %1104 = vmatprep.subr.mxu0 %v241
    %1105 = vmatpush1.msra.mxu0 %v240
    %1106 = vmatprep.subr.mxu0 %v239
    %1107 = vmatpush1.msra.mxu0 %v238
    %1108 = vmatprep.subr.mxu0 %v237
    %1109 = vmatpush1.msra.mxu0 %v236
    %1110 = vmatprep.subr.mxu0 %v235
    %1111 = vmatpush1.msra.mxu0 %v234
    %1112 = vmatprep.subr.mxu0 0.0
    %1113 = vmatpush2.msra.mxu0 0.0
    %1114 = vmatprep.subr.mxu0 0.0
    %1115 = vmatpush2.msra.mxu0 0.0
    %1116 = vmatprep.subr.mxu0 0.0
    %1117 = vmatpush2.msra.mxu0 0.0
    %1118 = vmatprep.subr.mxu0 0.0
    %1119 = vmatpush2.msra.mxu0 0.0
    %1120 = vmatprep.subr.mxu0 0.0
    %1121 = vmatpush2.msra.mxu0 0.0
    %1122 = vmatprep.subr.mxu0 0.0
    %1123 = vmatpush2.msra.mxu0 0.0
    %1124 = vmatprep.subr.mxu0 0.0
    %1125 = vmatpush2.msra.mxu0 0.0
    %1126 = vmatprep.subr.mxu0 0.0
    %1127 = vmatpush2.msra.mxu0 0.0
    %1128 = vmatprep.subr.mxu0 0.0
    %1129 = vmatpush2.msra.mxu0 0.0
    %1130 = vmatprep.subr.mxu0 0.0
    %1131 = vmatpush2.msra.mxu0 0.0
    %1132 = vmatprep.subr.mxu0 0.0
    %1133 = vmatpush2.msra.mxu0 0.0
    %1134 = vmatprep.subr.mxu0 0.0
    %1135 = vmatpush2.msra.mxu0 0.0
    %1136 = vmatprep.subr.mxu0 0.0
    %1137 = vmatpush2.msra.mxu0 0.0
    %1138 = vmatprep.subr.mxu0 0.0
    %1139 = vmatpush2.msra.mxu0 0.0
    %1140 = vmatprep.subr.mxu0 0.0
    %1141 = vmatpush2.msra.mxu0 0.0
    %1142 = vmatprep.subr.mxu0 0.0
    %1143 = vmatpush2.msra.mxu0 0.0
    %1144 = vmatprep.mubr.f32.mxu0 0.0
    %1145 = vmatmul.mubr.f32.gmra.mxu0 %v1078
    %v1146 = vpop.f32.mrf.mxu0
    %v1147 = vadd.f32 %v1075, %v1146
    %v1148 = vpop.f32.mrf.mxu0
    %v1149 = vadd.f32 %v1076, %v1148
    %1150 = vdwg.mxu0
    %v1151 = vxor.u32 %v1147, 2147483648
    %v1152 = vxor.u32 %v1149, 2147483648
    %v1153 = vmul.f32 %v1151, 1.442695
    %v1154 = vpow.pop %v1153
    %v1155 = vmul.f32 %v1152, 1.442695
    %v1156 = vpow.pop %v1155
    %v1157 = vadd.f32 %v1154, 1.0
    %v1158 = vadd.f32 %v1156, 1.0
    %v1159 = vrcp.pop %v1157
    %v1160 = vmul.f32 1.0, %v1159
    %v1161 = vrcp.pop %v1158
    %v1162 = vmul.f32 1.0, %v1161
    %v1163 = vmul.f32 %v1160, 2.0
    %v1164 = vsub.f32 %v1163, 1.0
    %v1165 = vmul.f32 %v1162, 2.0
    %v1166 = vsub.f32 %v1165, 1.0
    %v1167 = vmul.f32 %v1160, %v1045
    %1169 = vrot.lane.b32.xlu0 %v1164, 64
    %v1170 = vpop.permute.xlu0 %1169
    %v1172 = vmul.f32 %v1160, %v1170
    %1174 = vrot.lane.b32.xlu0 %v1172, 32
    %v1175 = vpop.permute.xlu0 %1174
    %v1177 = vadd.f32 %v1167, %v1175
    %v1178 = vmul.f32 %v1162, %v1056
    %1180 = vrot.lane.b32.xlu0 %v1166, 64
    %v1181 = vpop.permute.xlu0 %1180
    %v1183 = vmul.f32 %v1162, %v1181
    %1185 = vrot.lane.b32.xlu0 %v1183, 32
    %v1186 = vpop.permute.xlu0 %1185
    %v1188 = vadd.f32 %v1178, %v1186
    %1190 = vrot.lane.b32.xlu0 %v1177, 96
    %v1191 = vpop.permute.xlu0 %1190
    %v1193 = vsel %vm80, %v1191, %v1188
    %v1194 = vtanh.pop %v1193
    %1196 = vrot.lane.b32.xlu0 %v1160, 32
    %v1197 = vpop.permute.xlu0 %1196
    %1200 = vrot.lane.b32.xlu0 %v1162, 64
    %v1201 = vpop.permute.xlu0 %1200
    %v1203 = vsel %vm80, %v1197, %v1201
    %v1204 = vmul.f32 %v1203, %v1194
    %1205 = vst.msk [vmem:[%s529] sm:$0xff] %vm80, %v1204
    %1206 = vst.msk [vmem:[%s527] sm:$0xff] %vm389, %v1204
    %v1207 = vld [vmem:[%s256] sm:$0xff]
    %v1208 = vld [vmem:[%s252 + $0x8] sm:$0xff]
    %v1210 = vsel %vm258, %v1204, 0
    %1212 = vmatprep.subr.mxu0 0.0
    %1213 = vmatpush1.msra.mxu0 0.0
    %1214 = vmatprep.subr.mxu0 0.0
    %1215 = vmatpush1.msra.mxu0 0.0
    %1216 = vmatprep.subr.mxu0 0.0
    %1217 = vmatpush1.msra.mxu0 0.0
    %1218 = vmatprep.subr.mxu0 0.0
    %1219 = vmatpush1.msra.mxu0 0.0
    %1220 = vmatprep.subr.mxu0 0.0
    %1221 = vmatpush1.msra.mxu0 0.0
    %1222 = vmatprep.subr.mxu0 0.0
    %1223 = vmatpush1.msra.mxu0 0.0
    %1224 = vmatprep.subr.mxu0 0.0
    %1225 = vmatpush1.msra.mxu0 0.0
    %1226 = vmatprep.subr.mxu0 0.0
    %1227 = vmatpush1.msra.mxu0 0.0
    %1228 = vmatprep.subr.mxu0 %v249
    %1229 = vmatpush1.msra.mxu0 %v248
    %1230 = vmatprep.subr.mxu0 %v247
    %1231 = vmatpush1.msra.mxu0 %v246
    %1232 = vmatprep.subr.mxu0 %v245
    %1233 = vmatpush1.msra.mxu0 %v244
    %1234 = vmatprep.subr.mxu0 %v243
    %1235 = vmatpush1.msra.mxu0 %v242
    %1236 = vmatprep.subr.mxu0 %v241
    %1237 = vmatpush1.msra.mxu0 %v240
    %1238 = vmatprep.subr.mxu0 %v239
    %1239 = vmatpush1.msra.mxu0 %v238
    %1240 = vmatprep.subr.mxu0 %v237
    %1241 = vmatpush1.msra.mxu0 %v236
    %1242 = vmatprep.subr.mxu0 %v235
    %1243 = vmatpush1.msra.mxu0 %v234
    %1244 = vmatprep.subr.mxu0 0.0
    %1245 = vmatpush2.msra.mxu0 0.0
    %1246 = vmatprep.subr.mxu0 0.0
    %1247 = vmatpush2.msra.mxu0 0.0
    %1248 = vmatprep.subr.mxu0 0.0
    %1249 = vmatpush2.msra.mxu0 0.0
    %1250 = vmatprep.subr.mxu0 0.0
    %1251 = vmatpush2.msra.mxu0 0.0
    %1252 = vmatprep.subr.mxu0 0.0
    %1253 = vmatpush2.msra.mxu0 0.0
    %1254 = vmatprep.subr.mxu0 0.0
    %1255 = vmatpush2.msra.mxu0 0.0
    %1256 = vmatprep.subr.mxu0 0.0
    %1257 = vmatpush2.msra.mxu0 0.0
    %1258 = vmatprep.subr.mxu0 0.0
    %1259 = vmatpush2.msra.mxu0 0.0
    %1260 = vmatprep.subr.mxu0 0.0
    %1261 = vmatpush2.msra.mxu0 0.0
    %1262 = vmatprep.subr.mxu0 0.0
    %1263 = vmatpush2.msra.mxu0 0.0
    %1264 = vmatprep.subr.mxu0 0.0
    %1265 = vmatpush2.msra.mxu0 0.0
    %1266 = vmatprep.subr.mxu0 0.0
    %1267 = vmatpush2.msra.mxu0 0.0
    %1268 = vmatprep.subr.mxu0 0.0
    %1269 = vmatpush2.msra.mxu0 0.0
    %1270 = vmatprep.subr.mxu0 0.0
    %1271 = vmatpush2.msra.mxu0 0.0
    %1272 = vmatprep.subr.mxu0 0.0
    %1273 = vmatpush2.msra.mxu0 0.0
    %1274 = vmatprep.subr.mxu0 0.0
    %1275 = vmatpush2.msra.mxu0 0.0
    %1276 = vmatprep.mubr.f32.mxu0 0.0
    %1277 = vmatmul.mubr.f32.gmra.mxu0 %v1210
    %v1278 = vpop.f32.mrf.mxu0
    %v1279 = vadd.f32 %v1207, %v1278
    %v1280 = vpop.f32.mrf.mxu0
    %v1281 = vadd.f32 %v1208, %v1280
    %1282 = vdwg.mxu0
    %v1283 = vxor.u32 %v1279, 2147483648
    %v1284 = vxor.u32 %v1281, 2147483648
    %v1285 = vmul.f32 %v1283, 1.442695
    %v1286 = vpow.pop %v1285
    %v1287 = vmul.f32 %v1284, 1.442695
    %v1288 = vpow.pop %v1287
    %v1289 = vadd.f32 %v1286, 1.0
    %v1290 = vadd.f32 %v1288, 1.0
    %v1291 = vrcp.pop %v1289
    %v1292 = vmul.f32 1.0, %v1291
    %v1293 = vrcp.pop %v1290
    %v1294 = vmul.f32 1.0, %v1293
    %v1295 = vmul.f32 %v1292, 2.0
    %v1296 = vsub.f32 %v1295, 1.0
    %v1297 = vmul.f32 %v1294, 2.0
    %v1298 = vsub.f32 %v1297, 1.0
    %v1299 = vmul.f32 %v1292, %v1177
    %1301 = vrot.lane.b32.xlu0 %v1296, 64
    %v1302 = vpop.permute.xlu0 %1301
    %v1304 = vmul.f32 %v1292, %v1302
    %1306 = vrot.lane.b32.xlu0 %v1304, 32
    %v1307 = vpop.permute.xlu0 %1306
    %v1309 = vadd.f32 %v1299, %v1307
    %v1310 = vmul.f32 %v1294, %v1188
    %1312 = vrot.lane.b32.xlu0 %v1298, 64
    %v1313 = vpop.permute.xlu0 %1312
    %v1315 = vmul.f32 %v1294, %v1313
    %1317 = vrot.lane.b32.xlu0 %v1315, 32
    %v1318 = vpop.permute.xlu0 %1317
    %v1320 = vadd.f32 %v1310, %v1318
    %1322 = vrot.lane.b32.xlu0 %v1309, 96
    %v1323 = vpop.permute.xlu0 %1322
    %v1325 = vsel %vm80, %v1323, %v1320
    %v1326 = vtanh.pop %v1325
    %1328 = vrot.lane.b32.xlu0 %v1292, 32
    %v1329 = vpop.permute.xlu0 %1328
    %1332 = vrot.lane.b32.xlu0 %v1294, 64
    %v1333 = vpop.permute.xlu0 %1332
    %v1335 = vsel %vm80, %v1329, %v1333
    %v1336 = vmul.f32 %v1335, %v1326
    %1337 = vst.msk [vmem:[%s388] sm:$0xff] %vm80, %v1336
    %1338 = vst.msk [vmem:[#allocation3] sm:$0xff] %vm389, %v1336
    %v1339 = vld [vmem:[#allocation3] sm:$0xff]
    %v1340 = vld [vmem:[#allocation3 + $0x8] sm:$0xff]
    %v1341 = vld [vmem:[#allocation3 + $0x10] sm:$0xff]
    %v1342 = vld [vmem:[#allocation3 + $0x18] sm:$0xff]
    %v1343 = vld [vmem:[#allocation3 + $0x20] sm:$0xff]
    %v1344 = vld [vmem:[#allocation3 + $0x28] sm:$0xff]
    %v1345 = vld [vmem:[#allocation3 + $0x30] sm:$0xff]
    %v1346 = vld [vmem:[#allocation3 + $0x38] sm:$0xff]
    %v1347 = vld [vmem:[#allocation7] sm:$0xff]
    %v1348 = vld [vmem:[#allocation7 + $0x8] sm:$0xff]
    %v1349 = vld [vmem:[#allocation7 + $0x10] sm:$0xff]
    %v1350 = vld [vmem:[#allocation7 + $0x18] sm:$0xff]
    %v1351 = vld [vmem:[#allocation7 + $0x20] sm:$0xff]
    %v1352 = vld [vmem:[#allocation7 + $0x28] sm:$0xff]
    %v1353 = vld [vmem:[#allocation7 + $0x30] sm:$0xff]
    %v1354 = vld [vmem:[#allocation7 + $0x38] sm:$0xff]
    %v1355 = vld [vmem:[%s5] sm:$0x1]
    %v1357 = vlaneseq
    %v1358 = vshrl.u32 %v1357, 7
    %v1359 = vsub.s32 0, %v1358
    %v1360 = vrot.slane %v1355, %v1359
    %v1363 = vsel %vm258, %v1339, 0
    %v1366 = vsel %vm258, %v1340, 0
    %v1369 = vsel %vm258, %v1341, 0
    %v1372 = vsel %vm258, %v1342, 0
    %v1375 = vsel %vm258, %v1343, 0
    %v1378 = vsel %vm258, %v1344, 0
    %v1381 = vsel %vm258, %v1345, 0
    %v1384 = vsel %vm258, %v1346, 0
    %1386 = vmatprep.subr.mxu0 0.0
    %1387 = vmatpush1.msra.mxu0 0.0
    %1388 = vmatprep.subr.mxu0 0.0
    %1389 = vmatpush1.msra.mxu0 0.0
    %1390 = vmatprep.subr.mxu0 0.0
    %1391 = vmatpush1.msra.mxu0 0.0
    %1392 = vmatprep.subr.mxu0 0.0
    %1393 = vmatpush1.msra.mxu0 0.0
    %1394 = vmatprep.subr.mxu0 0.0
    %1395 = vmatpush1.msra.mxu0 0.0
    %1396 = vmatprep.subr.mxu0 0.0
    %1397 = vmatpush1.msra.mxu0 0.0
    %1398 = vmatprep.subr.mxu0 0.0
    %1399 = vmatpush1.msra.mxu0 0.0
    %1400 = vmatprep.subr.mxu0 0.0
    %1401 = vmatpush1.msra.mxu0 0.0
    %1402 = vmatprep.subr.mxu0 0.0
    %1403 = vmatpush1.msra.mxu0 %v1354
    %1404 = vmatprep.subr.mxu0 0.0
    %1405 = vmatpush1.msra.mxu0 %v1353
    %1406 = vmatprep.subr.mxu0 0.0
    %1407 = vmatpush1.msra.mxu0 %v1352
    %1408 = vmatprep.subr.mxu0 0.0
    %1409 = vmatpush1.msra.mxu0 %v1351
    %1410 = vmatprep.subr.mxu0 0.0
    %1411 = vmatpush1.msra.mxu0 %v1350
    %1412 = vmatprep.subr.mxu0 0.0
    %1413 = vmatpush1.msra.mxu0 %v1349
    %1414 = vmatprep.subr.mxu0 0.0
    %1415 = vmatpush1.msra.mxu0 %v1348
    %1416 = vmatprep.subr.mxu0 0.0
    %1417 = vmatpush1.msra.mxu0 %v1347
    %1418 = vmatprep.subr.mxu0 0.0
    %1419 = vmatpush2.msra.mxu0 0.0
    %1420 = vmatprep.subr.mxu0 0.0
    %1421 = vmatpush2.msra.mxu0 0.0
    %1422 = vmatprep.subr.mxu0 0.0
    %1423 = vmatpush2.msra.mxu0 0.0
    %1424 = vmatprep.subr.mxu0 0.0
    %1425 = vmatpush2.msra.mxu0 0.0
    %1426 = vmatprep.subr.mxu0 0.0
    %1427 = vmatpush2.msra.mxu0 0.0
    %1428 = vmatprep.subr.mxu0 0.0
    %1429 = vmatpush2.msra.mxu0 0.0
    %1430 = vmatprep.subr.mxu0 0.0
    %1431 = vmatpush2.msra.mxu0 0.0
    %1432 = vmatprep.subr.mxu0 0.0
    %1433 = vmatpush2.msra.mxu0 0.0
    %1434 = vmatprep.subr.mxu0 0.0
    %1435 = vmatpush2.msra.mxu0 0.0
    %1436 = vmatprep.subr.mxu0 0.0
    %1437 = vmatpush2.msra.mxu0 0.0
    %1438 = vmatprep.subr.mxu0 0.0
    %1439 = vmatpush2.msra.mxu0 0.0
    %1440 = vmatprep.subr.mxu0 0.0
    %1441 = vmatpush2.msra.mxu0 0.0
    %1442 = vmatprep.subr.mxu0 0.0
    %1443 = vmatpush2.msra.mxu0 0.0
    %1444 = vmatprep.subr.mxu0 0.0
    %1445 = vmatpush2.msra.mxu0 0.0
    %1446 = vmatprep.subr.mxu0 0.0
    %1447 = vmatpush2.msra.mxu0 0.0
    %1448 = vmatprep.subr.mxu0 0.0
    %1449 = vmatpush2.msra.mxu0 0.0
    %1450 = vmatprep.mubr.f32.mxu0 0.0
    %1451 = vmatmul.mubr.f32.gmra.mxu0 %v1363
    %v1452 = vpop.f32.mrf.mxu0
    %v1453 = vadd.f32 %v1360, %v1452
    %v1454 = vpop.f32.mrf.mxu0
    %1455 = vmatprep.mubr.f32.mxu0 0.0
    %1456 = vmatmul.mubr.f32.gmra.mxu0 %v1366
    %v1457 = vpop.f32.mrf.mxu0
    %v1458 = vadd.f32 %v1360, %v1457
    %v1459 = vpop.f32.mrf.mxu0
    %1460 = vmatprep.mubr.f32.mxu0 0.0
    %1461 = vmatmul.mubr.f32.gmra.mxu0 %v1369
    %v1462 = vpop.f32.mrf.mxu0
    %v1463 = vadd.f32 %v1360, %v1462
    %v1464 = vpop.f32.mrf.mxu0
    %1465 = vmatprep.mubr.f32.mxu0 0.0
    %1466 = vmatmul.mubr.f32.gmra.mxu0 %v1372
    %v1467 = vpop.f32.mrf.mxu0
    %v1468 = vadd.f32 %v1360, %v1467
    %v1469 = vpop.f32.mrf.mxu0
    %1470 = vmatprep.mubr.f32.mxu0 0.0
    %1471 = vmatmul.mubr.f32.gmra.mxu0 %v1375
    %v1472 = vpop.f32.mrf.mxu0
    %v1473 = vadd.f32 %v1360, %v1472
    %v1474 = vpop.f32.mrf.mxu0
    %1475 = vmatprep.mubr.f32.mxu0 0.0
    %1476 = vmatmul.mubr.f32.gmra.mxu0 %v1378
    %v1477 = vpop.f32.mrf.mxu0
    %v1478 = vadd.f32 %v1360, %v1477
    %v1479 = vpop.f32.mrf.mxu0
    %1480 = vmatprep.mubr.f32.mxu0 0.0
    %1481 = vmatmul.mubr.f32.gmra.mxu0 %v1381
    %v1482 = vpop.f32.mrf.mxu0
    %v1483 = vadd.f32 %v1360, %v1482
    %v1484 = vpop.f32.mrf.mxu0
    %1485 = vmatprep.mubr.f32.mxu0 0.0
    %1486 = vmatmul.mubr.f32.gmra.mxu0 %v1384
    %v1487 = vpop.f32.mrf.mxu0
    %v1488 = vadd.f32 %v1360, %v1487
    %v1489 = vpop.f32.mrf.mxu0
    %1490 = vdwg.mxu0
    %1491 = vmax.xlane.f32.xlu0 %v1453
    %v1492 = vpop.xlane.xlu0 %1491
    %1493 = vmax.xlane.f32.xlu0 %v1458
    %v1494 = vpop.xlane.xlu0 %1493
    %1495 = vmax.xlane.f32.xlu0 %v1463
    %v1496 = vpop.xlane.xlu0 %1495
    %1497 = vmax.xlane.f32.xlu0 %v1468
    %v1498 = vpop.xlane.xlu0 %1497
    %1499 = vmax.xlane.f32.xlu0 %v1473
    %v1500 = vpop.xlane.xlu0 %1499
    %1501 = vmax.xlane.f32.xlu0 %v1478
    %v1502 = vpop.xlane.xlu0 %1501
    %1503 = vmax.xlane.f32.xlu0 %v1483
    %v1504 = vpop.xlane.xlu0 %1503
    %1505 = vmax.xlane.f32.xlu0 %v1488
    %v1506 = vpop.xlane.xlu0 %1505
    %v1507 = vsub.f32 %v1453, %v1492
    %v1508 = vsub.f32 %v1458, %v1494
    %v1509 = vsub.f32 %v1463, %v1496
    %v1510 = vsub.f32 %v1468, %v1498
    %v1511 = vsub.f32 %v1473, %v1500
    %v1512 = vsub.f32 %v1478, %v1502
    %v1513 = vsub.f32 %v1483, %v1504
    %v1514 = vsub.f32 %v1488, %v1506
    %v1515 = vmul.f32 %v1507, 1.442695
    %v1516 = vpow.pop %v1515
    %v1517 = vmul.f32 %v1508, 1.442695
    %v1518 = vpow.pop %v1517
    %v1519 = vmul.f32 %v1509, 1.442695
    %v1520 = vpow.pop %v1519
    %v1521 = vmul.f32 %v1510, 1.442695
    %v1522 = vpow.pop %v1521
    %v1523 = vmul.f32 %v1511, 1.442695
    %v1524 = vpow.pop %v1523
    %v1525 = vmul.f32 %v1512, 1.442695
    %v1526 = vpow.pop %v1525
    %v1527 = vmul.f32 %v1513, 1.442695
    %v1528 = vpow.pop %v1527
    %v1529 = vmul.f32 %v1514, 1.442695
    %v1530 = vpow.pop %v1529
    %1531 = vadd.xlane.f32.xlu0 %v1516
    %v1532 = vpop.xlane.xlu0 %1531
    %1533 = vadd.xlane.f32.xlu0 %v1518
    %v1534 = vpop.xlane.xlu0 %1533
    %1535 = vadd.xlane.f32.xlu0 %v1520
    %v1536 = vpop.xlane.xlu0 %1535
    %1537 = vadd.xlane.f32.xlu0 %v1522
    %v1538 = vpop.xlane.xlu0 %1537
    %1539 = vadd.xlane.f32.xlu0 %v1524
    %v1540 = vpop.xlane.xlu0 %1539
    %1541 = vadd.xlane.f32.xlu0 %v1526
    %v1542 = vpop.xlane.xlu0 %1541
    %1543 = vadd.xlane.f32.xlu0 %v1528
    %v1544 = vpop.xlane.xlu0 %1543
    %1545 = vadd.xlane.f32.xlu0 %v1530
    %v1546 = vpop.xlane.xlu0 %1545
    %v1547 = vlog2.pop %v1532
    %v1548 = vmul.f32 %v1547, 0.6931472
    %v1549 = vlog2.pop %v1534
    %v1550 = vmul.f32 %v1549, 0.6931472
    %v1551 = vlog2.pop %v1536
    %v1552 = vmul.f32 %v1551, 0.6931472
    %v1553 = vlog2.pop %v1538
    %v1554 = vmul.f32 %v1553, 0.6931472
    %v1555 = vlog2.pop %v1540
    %v1556 = vmul.f32 %v1555, 0.6931472
    %v1557 = vlog2.pop %v1542
    %v1558 = vmul.f32 %v1557, 0.6931472
    %v1559 = vlog2.pop %v1544
    %v1560 = vmul.f32 %v1559, 0.6931472
    %v1561 = vlog2.pop %v1546
    %v1562 = vmul.f32 %v1561, 0.6931472
    %v1563 = vadd.f32 %v1492, %v1548
    %v1564 = vadd.f32 %v1494, %v1550
    %v1565 = vadd.f32 %v1496, %v1552
    %v1566 = vadd.f32 %v1498, %v1554
    %v1567 = vadd.f32 %v1500, %v1556
    %v1568 = vadd.f32 %v1502, %v1558
    %v1569 = vadd.f32 %v1504, %v1560
    %v1570 = vadd.f32 %v1506, %v1562
    %v1571 = vsub.f32 %v1453, %v1563
    %v1572 = vsub.f32 %v1458, %v1564
    %v1573 = vsub.f32 %v1463, %v1565
    %v1574 = vsub.f32 %v1468, %v1566
    %v1575 = vsub.f32 %v1473, %v1567
    %v1576 = vsub.f32 %v1478, %v1568
    %v1577 = vsub.f32 %v1483, %v1569
    %v1578 = vsub.f32 %v1488, %v1570
    %1579 = vst [vmem:[#allocation9] sm:$0xff] %v1571
    %1580 = vst [vmem:[#allocation9 + $0x8] sm:$0xff] %v1572
    %1581 = vst [vmem:[#allocation9 + $0x10] sm:$0xff] %v1573
    %1582 = vst [vmem:[#allocation9 + $0x18] sm:$0xff] %v1574
    %1583 = vst [vmem:[#allocation9 + $0x20] sm:$0xff] %v1575
    %1584 = vst [vmem:[#allocation9 + $0x28] sm:$0xff] %v1576
    %1585 = vst [vmem:[#allocation9 + $0x30] sm:$0xff] %v1577
    %1586 = vst [vmem:[#allocation9 + $0x38] sm:$0xff] %v1578
    // Predicated region
    $region34: #{tpu_custom_call.1} parent=1 // pred_check
      _
    $region35: #{tpu_custom_call.1} parent=1 // pred_check_branch
      %1588 = sbr.rel (0) target = $region37
    $region36: #{tpu_custom_call.1} parent=1 // pred_region
      %s1590 = ssub.s32 1024, 1024
      %1591 = vsyncadd [#allocation6], %s1590
      %s1592 = sshll.u32 [#allocation9], 4
      %s1593 = int_to_ptr.vmem [resolvable:$true] %s1592
      %1598 = dma.vmem_to_hbm [thread:$0]  %s1593, 1024, %s6, [#allocation6], 128, 128, 8
    $region37: #{tpu_custom_call.1} parent=1 // pred_fallthru
      _
    // Predicated region
    $region38: #{tpu_custom_call.1} parent=1 // pred_check
      _
    $region39: #{tpu_custom_call.1} parent=1 // pred_check_branch
      %1600 = sbr.rel (0) target = $region41
    $region40: #{tpu_custom_call.1} parent=1 // pred_region
      %1601 = dma.done [#allocation6], 1024
    $region41: #{tpu_custom_call.1} parent=1 // pred_fallthru
      _
    %1602 = vsyncpa [#allocation5], 1
    %1603 = vsyncpa [#allocation8], 1
    %1604 = vsyncpa [#allocation6], 1

</llo_original>
